<compile_context>
chip_gen: v7x
topology: tpu7x:2x2x1
jax: 0.10.0
libtpu: 0.0.40
codegen_flags: <defaults>
</compile_context>

<pallas_src>
import functools

import jax
import jax.numpy as jnp
import numpy as np
from jax.experimental import pallas as pl
from jax.experimental.pallas import tpu as pltpu


# ----------------------------------------------------------------------------
# Kernel
# ----------------------------------------------------------------------------
def _wgen_kernel(z_ref, w1_ref, w2_ref, w3_ref, w4_ref, b_ref, out_ref, *, dims):
    """One batch tile of the fused 4-layer MLP. z is bf16, weights bf16,
    biases f32 (concatenated), accumulation and elementwise in f32."""
    dim1, dim2, dim3, out_dim = dims
    o1 = 0
    o2 = dim1
    o3 = dim1 + dim2
    o4 = dim1 + dim2 + dim3

    x = z_ref[...]                                                 # bf16 (tile_b, Zd)

    h1 = jnp.dot(x, w1_ref[...], preferred_element_type=jnp.float32)
    h1 = jnp.maximum(h1 + b_ref[:, o1:o1 + dim1], 0.0)            # ReLU (f32)

    h2 = jnp.dot(h1.astype(jnp.bfloat16), w2_ref[...],
                 preferred_element_type=jnp.float32)
    h2 = jnp.maximum(h2 + b_ref[:, o2:o2 + dim2], 0.0)            # ReLU (f32)

    h3 = jnp.dot(h2.astype(jnp.bfloat16), w3_ref[...],
                 preferred_element_type=jnp.float32)
    h3 = jnp.maximum(h3 + b_ref[:, o3:o3 + dim3], 0.0)            # ReLU (f32)

    h4 = jnp.dot(h3.astype(jnp.bfloat16), w4_ref[...],
                 preferred_element_type=jnp.float32) + b_ref[:, o4:o4 + out_dim]
    out_ref[...] = (2.0 * jnp.tanh(h4)).astype(out_ref.dtype)     # 2 * tanh


# ----------------------------------------------------------------------------
# Tile selection (generation-aware)
# ----------------------------------------------------------------------------
_TILE_CANDIDATES = (512, 256, 128, 64, 32, 16, 8)


def _num_tensorcores():
    """2 for megacore chips (v7x), else 1. Trace-time only."""
    try:
        kind = jax.devices()[0].device_kind.lower()
    except Exception:
        return 1
    return 2 if "v7" in kind else 1


def _pick_tile_b(B, num_cores):
    if num_cores <= 1:
        # Single TC (v5e/v6e): one big step minimizes fixed per-step overhead.
        # Even tile_b=2048 x (Zd + out_dim) activations is << VMEM.
        if B <= 2048:
            return B
        for t in _TILE_CANDIDATES:
            if B % t == 0:
                return t
        return B
    # Megacore (v7x): even step count so both TCs get equal work;
    # prefer >= 4 steps so each core still double-buffers z-in / out writeback.
    for min_steps in (4, 2):
        for t in _TILE_CANDIDATES:
            steps = B // t
            if B % t == 0 and steps >= min_steps and steps % 2 == 0:
                return t
    return B  # fallback: single full-extent step (always legal)


# ----------------------------------------------------------------------------
# Wrapper (jitted -- no eager dispatch / no per-call casts in the hot path)
# ----------------------------------------------------------------------------
@functools.partial(jax.jit, static_argnames=("tile_b", "out_dtype"))
def wgen_forward(z, weights, bias_cat, tile_b=None, out_dtype=jnp.float32):
    """Fused Wgen MLP.

    z:        (B, Z_dim) float32/bf16
    weights:  tuple of 4 bf16 arrays, shapes (Z_dim,dim1),(dim1,dim2),(dim2,dim3),(dim3,out_dim)
    bias_cat: (1, dim1+dim2+dim3+out_dim) float32 (from prepare_params)
    Returns (B, out_dim) in out_dtype (default f32; pass jnp.bfloat16 if the
    consumer tolerates it to halve the largest HBM stream).
    """
    w1, w2, w3, w4 = weights
    B, Zd = z.shape
    dims = (w1.shape[1], w2.shape[1], w3.shape[1], w4.shape[1])
    out_dim = dims[-1]

    if tile_b is None:
        tile_b = _pick_tile_b(B, _num_tensorcores())
    assert B % tile_b == 0, "batch must be divisible by the batch tile"
    # TODO(synk): no padding path for B not divisible by 8 / tile_b.

    # Cast z once at the producer (fused inside this jit) -> bf16 DMA into kernel.
    z = z.astype(jnp.bfloat16)

    # Grid-invariant params: constant index_map + single-buffered => resident,
    # no per-step re-DMA.
    resident = lambda arr: pl.BlockSpec(arr.shape, lambda i: (0, 0),
                                        pipeline_mode=pl.Buffered(1))

    grid_spec = pltpu.PrefetchScalarGridSpec(
        num_scalar_prefetch=0,
        grid=(B // tile_b,),
        in_specs=[
            pl.BlockSpec((tile_b, Zd), lambda i: (i, 0)),   # z tile (pipelined)
            resident(w1), resident(w2), resident(w3), resident(w4),
            resident(bias_cat),
        ],
        out_specs=pl.BlockSpec((tile_b, out_dim), lambda i: (i, 0)),
    )

    return pl.pallas_call(
        functools.partial(_wgen_kernel, dims=dims),
        out_shape=jax.ShapeDtypeStruct((B, out_dim), out_dtype),
        grid_spec=grid_spec,
        compiler_params=pltpu.CompilerParams(
            dimension_semantics=("parallel",)),   # batch axis sharded on v7x megacore
    )(z, w1, w2, w3, w4, bias_cat)


# ----------------------------------------------------------------------------
# Parameters
# ----------------------------------------------------------------------------
def init_params(key, z_dim, dim1, dim2, dim3, out_dim):
    """Deterministic nn.Linear-style init: U(-1/sqrt(fan_in), 1/sqrt(fan_in)).
    Weights stored as (in, out); when loading a real torch checkpoint,
    transpose nn.Linear's (out, in) weights first."""
    dims = [(z_dim, dim1), (dim1, dim2), (dim2, dim3), (dim3, out_dim)]
    params = []
    for fan_in, fan_out in dims:
        key, kw, kb = jax.random.split(key, 3)
        bound = 1.0 / np.sqrt(fan_in)
        w = jax.random.uniform(kw, (fan_in, fan_out), jnp.float32, -bound, bound)
        b = jax.random.uniform(kb, (1, fan_out), jnp.float32, -bound, bound)
        params.append((w, b))
    return params


def prepare_params(params):
    """ONE-TIME conversion (outside the hot path): bf16 weights for the MXU,
    and the four f32 biases concatenated into a single lane-dense operand."""
    weights = tuple(w.astype(jnp.bfloat16) for (w, _) in params)
    bias_cat = jnp.concatenate(
        [b.astype(jnp.float32).reshape(1, -1) for (_, b) in params], axis=1)
    return weights, bias_cat


def wgen_reference(z, params):
    """Pure-JAX f32 reference of the PyTorch forward (2 * model(z))."""
    x = z
    for i, (w, b) in enumerate(params):
        x = x @ w.astype(jnp.float32) + b
        x = jnp.maximum(x, 0.0) if i < 3 else jnp.tanh(x)
    return 2.0 * x


# ----------------------------------------------------------------------------
# Smoke test
# ----------------------------------------------------------------------------
if __name__ == "__main__":
    # Shape-consistent config (args.Z_dim / dim1 / dim2 / dim3 / out_dim).
    Z_dim, dim1, dim2, dim3, out_dim = 32, 128, 128, 128, 256
    batch = 512   # v5e/v6e -> 1 grid step; v7x -> 4 steps of 128 (2 per core)

    key = jax.random.PRNGKey(0)
    key, kz = jax.random.split(key)
    z = jax.random.normal(kz, (batch, Z_dim), dtype=jnp.float32)
    params = init_params(key, Z_dim, dim1, dim2, dim3, out_dim)
    weights, bias_cat = prepare_params(params)   # one-time casts, not per call

    out = wgen_forward(z, weights, bias_cat)
    out = jax.block_until_ready(out)

    ref = wgen_reference(z, params)
    # bf16 matmul inputs (weights + rounded activations) with f32 accumulation
    # -> relaxed tolerance vs the f32 reference. Error compounds over 4 layers;
    # acceptable for a GAN generator.
    np.testing.assert_allclose(np.asarray(out), np.asarray(ref),
                               rtol=2e-2, atol=5e-2)

    print("KERNEL_OK")
</pallas_src>

<mosaic_0001>
module attributes {stable_mosaic.version = 11 : i64} {
  func.func @_wgen_kernel(%arg0: i32, %arg1: memref<512x32xbf16, #tpu.memory_space<vmem>>, %arg2: memref<32x128xbf16, #tpu.memory_space<vmem>>, %arg3: memref<128x128xbf16, #tpu.memory_space<vmem>>, %arg4: memref<128x128xbf16, #tpu.memory_space<vmem>>, %arg5: memref<128x256xbf16, #tpu.memory_space<vmem>>, %arg6: memref<1x640xf32, #tpu.memory_space<vmem>>, %arg7: memref<512x256xf32, #tpu.memory_space<vmem>>) attributes {dimension_semantics = [#tpu.dimension_semantics<parallel>], iteration_bounds = array<i64: 1>, scalar_prefetch = 0 : i64, scratch_operands = 0 : i64, tpu.core_type = #tpu.core_type<tc>, window_params = [{transform_indices = @transform_0, window_bounds = array<i64: 512, 32>}, {pipeline_mode = #tpu.pipeline_mode<synchronous>, transform_indices = @transform_1, window_bounds = array<i64: 32, 128>}, {pipeline_mode = #tpu.pipeline_mode<synchronous>, transform_indices = @transform_2, window_bounds = array<i64: 128, 128>}, {pipeline_mode = #tpu.pipeline_mode<synchronous>, transform_indices = @transform_3, window_bounds = array<i64: 128, 128>}, {pipeline_mode = #tpu.pipeline_mode<synchronous>, transform_indices = @transform_4, window_bounds = array<i64: 128, 256>}, {pipeline_mode = #tpu.pipeline_mode<synchronous>, transform_indices = @transform_5, window_bounds = array<i64: 1, 640>}, {transform_indices = @transform_6, window_bounds = array<i64: 512, 256>}]} {
    %c0 = arith.constant 0 : index
    %c0_0 = arith.constant 0 : index
    %0 = vector.load %arg1[%c0, %c0_0] : memref<512x32xbf16, #tpu.memory_space<vmem>>, vector<512x32xbf16>
    %c0_1 = arith.constant 0 : index
    %c0_2 = arith.constant 0 : index
    %1 = vector.load %arg2[%c0_1, %c0_2] : memref<32x128xbf16, #tpu.memory_space<vmem>>, vector<32x128xbf16>
    %cst = arith.constant dense<0.000000e+00> : vector<512x128xf32>
    %2 = tpu.matmul %0, %1, %cst {dimension_numbers = #tpu.dot_dimension_numbers<[1], [0], [0], [1], [0, 0, 1, 1], [], []>} : vector<512x32xbf16>, vector<32x128xbf16>, vector<512x128xf32> -> vector<512x128xf32>
    %c0_3 = arith.constant 0 : index
    %c0_4 = arith.constant 0 : index
    %3 = vector.load %arg6[%c0_3, %c0_4] : memref<1x640xf32, #tpu.memory_space<vmem>>, vector<1x128xf32>
    %4 = vector.broadcast %3 : vector<1x128xf32> to vector<512x128xf32>
    %5 = arith.addf %2, %4 : vector<512x128xf32>
    %cst_5 = arith.constant 0.000000e+00 : f32
    %6 = vector.broadcast %cst_5 : f32 to vector<512x128xf32>
    %7 = arith.maximumf %5, %6 : vector<512x128xf32>
    %8 = arith.truncf %7 : vector<512x128xf32> to vector<512x128xbf16>
    %c0_6 = arith.constant 0 : index
    %c0_7 = arith.constant 0 : index
    %9 = vector.load %arg3[%c0_6, %c0_7] : memref<128x128xbf16, #tpu.memory_space<vmem>>, vector<128x128xbf16>
    %cst_8 = arith.constant dense<0.000000e+00> : vector<512x128xf32>
    %10 = tpu.matmul %8, %9, %cst_8 {dimension_numbers = #tpu.dot_dimension_numbers<[1], [0], [0], [1], [0, 0, 1, 1], [], []>} : vector<512x128xbf16>, vector<128x128xbf16>, vector<512x128xf32> -> vector<512x128xf32>
    %c0_9 = arith.constant 0 : index
    %c128 = arith.constant 128 : index
    %11 = vector.load %arg6[%c0_9, %c128] : memref<1x640xf32, #tpu.memory_space<vmem>>, vector<1x128xf32>
    %12 = vector.broadcast %11 : vector<1x128xf32> to vector<512x128xf32>
    %13 = arith.addf %10, %12 : vector<512x128xf32>
    %cst_10 = arith.constant 0.000000e+00 : f32
    %14 = vector.broadcast %cst_10 : f32 to vector<512x128xf32>
    %15 = arith.maximumf %13, %14 : vector<512x128xf32>
    %16 = arith.truncf %15 : vector<512x128xf32> to vector<512x128xbf16>
    %c0_11 = arith.constant 0 : index
    %c0_12 = arith.constant 0 : index
    %17 = vector.load %arg4[%c0_11, %c0_12] : memref<128x128xbf16, #tpu.memory_space<vmem>>, vector<128x128xbf16>
    %cst_13 = arith.constant dense<0.000000e+00> : vector<512x128xf32>
    %18 = tpu.matmul %16, %17, %cst_13 {dimension_numbers = #tpu.dot_dimension_numbers<[1], [0], [0], [1], [0, 0, 1, 1], [], []>} : vector<512x128xbf16>, vector<128x128xbf16>, vector<512x128xf32> -> vector<512x128xf32>
    %c0_14 = arith.constant 0 : index
    %c256 = arith.constant 256 : index
    %19 = vector.load %arg6[%c0_14, %c256] : memref<1x640xf32, #tpu.memory_space<vmem>>, vector<1x128xf32>
    %20 = vector.broadcast %19 : vector<1x128xf32> to vector<512x128xf32>
    %21 = arith.addf %18, %20 : vector<512x128xf32>
    %cst_15 = arith.constant 0.000000e+00 : f32
    %22 = vector.broadcast %cst_15 : f32 to vector<512x128xf32>
    %23 = arith.maximumf %21, %22 : vector<512x128xf32>
    %24 = arith.truncf %23 : vector<512x128xf32> to vector<512x128xbf16>
    %c0_16 = arith.constant 0 : index
    %c0_17 = arith.constant 0 : index
    %25 = vector.load %arg5[%c0_16, %c0_17] : memref<128x256xbf16, #tpu.memory_space<vmem>>, vector<128x256xbf16>
    %cst_18 = arith.constant dense<0.000000e+00> : vector<512x256xf32>
    %26 = tpu.matmul %24, %25, %cst_18 {dimension_numbers = #tpu.dot_dimension_numbers<[1], [0], [0], [1], [0, 0, 1, 1], [], []>} : vector<512x128xbf16>, vector<128x256xbf16>, vector<512x256xf32> -> vector<512x256xf32>
    %c0_19 = arith.constant 0 : index
    %c384 = arith.constant 384 : index
    %27 = vector.load %arg6[%c0_19, %c384] : memref<1x640xf32, #tpu.memory_space<vmem>>, vector<1x256xf32>
    %28 = vector.broadcast %27 : vector<1x256xf32> to vector<512x256xf32>
    %29 = arith.addf %26, %28 : vector<512x256xf32>
    %30 = math.tanh %29 : vector<512x256xf32>
    %cst_20 = arith.constant 2.000000e+00 : f32
    %31 = vector.broadcast %cst_20 : f32 to vector<512x256xf32>
    %32 = arith.mulf %31, %30 : vector<512x256xf32>
    %c0_21 = arith.constant 0 : index
    %c0_22 = arith.constant 0 : index
    %33 = vector.load %arg7[%c0_21, %c0_22] : memref<512x256xf32, #tpu.memory_space<vmem>>, vector<512x256xf32>
    tpu.vector_store %arg7[%c0_21, %c0_22], %32 {strides = array<i32>} : memref<512x256xf32, #tpu.memory_space<vmem>>, vector<512x256xf32>,
    return
  }
  func.func @transform_0(%arg0: i32) -> (i32, i32) {
    %c0_i32 = arith.constant 0 : i32
    %c0_i32_0 = arith.constant 0 : i32
    return %arg0, %c0_i32 : i32, i32
  }
  func.func @transform_1(%arg0: i32) -> (i32, i32) {
    %c0_i32 = arith.constant 0 : i32
    %c0_i32_0 = arith.constant 0 : i32
    %c0_i32_1 = arith.constant 0 : i32
    return %c0_i32, %c0_i32_0 : i32, i32
  }
  func.func @transform_2(%arg0: i32) -> (i32, i32) {
    %c0_i32 = arith.constant 0 : i32
    %c0_i32_0 = arith.constant 0 : i32
    %c0_i32_1 = arith.constant 0 : i32
    return %c0_i32, %c0_i32_0 : i32, i32
  }
  func.func @transform_3(%arg0: i32) -> (i32, i32) {
    %c0_i32 = arith.constant 0 : i32
    %c0_i32_0 = arith.constant 0 : i32
    %c0_i32_1 = arith.constant 0 : i32
    return %c0_i32, %c0_i32_0 : i32, i32
  }
  func.func @transform_4(%arg0: i32) -> (i32, i32) {
    %c0_i32 = arith.constant 0 : i32
    %c0_i32_0 = arith.constant 0 : i32
    %c0_i32_1 = arith.constant 0 : i32
    return %c0_i32, %c0_i32_0 : i32, i32
  }
  func.func @transform_5(%arg0: i32) -> (i32, i32) {
    %c0_i32 = arith.constant 0 : i32
    %c0_i32_0 = arith.constant 0 : i32
    %c0_i32_1 = arith.constant 0 : i32
    return %c0_i32, %c0_i32_0 : i32, i32
  }
  func.func @transform_6(%arg0: i32) -> (i32, i32) {
    %c0_i32 = arith.constant 0 : i32
    %c0_i32_0 = arith.constant 0 : i32
    return %arg0, %c0_i32 : i32, i32
  }
}

</mosaic_0001>

<llo_original>
// kernel: wgen_forward.1
$region0: #{wgen_forward.1}
  #allocation0 [shape = 'u32[]', space=smem, size = 0x4, offset = 0x4, fixed_abs, tag = 'smem constant byte address 0x4 - core index']
  #allocation1 [shape = 'u32[144,128]{1,0:T(1,128)}', space=vmem, size = 0x12000, scoped, tag = 'internal scratch']
  %s0 = inlined_call_operand.vmem [shape: bf16[512,32], index: 0, kind: input, shape index: {}]
  %s1 = inlined_call_operand.vmem [shape: bf16[32,128], index: 1, kind: input, shape index: {}]
  %s2 = inlined_call_operand.vmem [shape: bf16[128,128], index: 2, kind: input, shape index: {}]
  %s3 = inlined_call_operand.vmem [shape: bf16[128,128], index: 3, kind: input, shape index: {}]
  %s4 = inlined_call_operand.vmem [shape: bf16[128,256], index: 4, kind: input, shape index: {}]
  %s5 = inlined_call_operand.vmem [shape: f32[1,640], index: 5, kind: input, shape index: {}]
  %s6 = inlined_call_operand.hbm [shape: f32[512,256], index: 6, kind: output, shape index: {}]
  %s7 = sld [smem:[#allocation0]]
  $region34: #{wgen_forward.1} parent=0
    _
  %s9 = ssub.s32 1, %s7
  %s10 = scalar_select 0, %s9, %s7
  $region1: #{wgen_forward.1} parent=0
    #allocation2 [shape = 'u8[524288]{0}', space=vmem, size = 0x80000, scoped, tag = 'output window, operand 0, single buffered']
    #allocation3 [shape = 's32[1]{0}', space=sflag, size = 0x4, scoped, tag = 'scoped memory for wgen_forward.1']
    %11 = vsyncpa [#allocation3], 0
    // Predicated region
    $region2: #{wgen_forward.1} parent=1 // pred_check
      _
    $region3: #{wgen_forward.1} parent=1 // pred_check_branch
      %13 = sbr.rel (0) target = $region5
    $region4: #{wgen_forward.1} parent=1 // pred_region
      _
    $region5: #{wgen_forward.1} parent=1 // pred_fallthru
      _
    // Predicated region
    $region6: #{wgen_forward.1} parent=1 // pred_check
      _
    $region7: #{wgen_forward.1} parent=1 // pred_check_branch
      %15 = sbr.rel (0) target = $region9
    $region8: #{wgen_forward.1} parent=1 // pred_region
      _
    $region9: #{wgen_forward.1} parent=1 // pred_fallthru
      _
    // Predicated region
    $region10: #{wgen_forward.1} parent=1 // pred_check
      _
    $region11: #{wgen_forward.1} parent=1 // pred_check_branch
      %17 = sbr.rel (0) target = $region13
    $region12: #{wgen_forward.1} parent=1 // pred_region
      _
    $region13: #{wgen_forward.1} parent=1 // pred_fallthru
      _
    // Predicated region
    $region14: #{wgen_forward.1} parent=1 // pred_check
      _
    $region15: #{wgen_forward.1} parent=1 // pred_check_branch
      %19 = sbr.rel (0) target = $region17
    $region16: #{wgen_forward.1} parent=1 // pred_region
      _
    $region17: #{wgen_forward.1} parent=1 // pred_fallthru
      _
    // Predicated region
    $region18: #{wgen_forward.1} parent=1 // pred_check
      _
    $region19: #{wgen_forward.1} parent=1 // pred_check_branch
      %21 = sbr.rel (0) target = $region21
    $region20: #{wgen_forward.1} parent=1 // pred_region
      _
    $region21: #{wgen_forward.1} parent=1 // pred_fallthru
      _
    // Predicated region
    $region22: #{wgen_forward.1} parent=1 // pred_check
      _
    $region23: #{wgen_forward.1} parent=1 // pred_check_branch
      %23 = sbr.rel (0) target = $region25
    $region24: #{wgen_forward.1} parent=1 // pred_region
      _
    $region25: #{wgen_forward.1} parent=1 // pred_fallthru
      _
    %v25 = vld [vmem:[%s0] sm:$0xf]
    %v26 = vld [vmem:[%s0 + $0x4] sm:$0xf]
    %v27 = vld [vmem:[%s0 + $0x8] sm:$0xf]
    %v28 = vld [vmem:[%s0 + $0xc] sm:$0xf]
    %v29 = vld [vmem:[%s0 + $0x10] sm:$0xf]
    %v30 = vld [vmem:[%s0 + $0x14] sm:$0xf]
    %v31 = vld [vmem:[%s0 + $0x18] sm:$0xf]
    %v32 = vld [vmem:[%s0 + $0x1c] sm:$0xf]
    %v33 = vld [vmem:[%s0 + $0x20] sm:$0xf]
    %v34 = vld [vmem:[%s0 + $0x24] sm:$0xf]
    %v35 = vld [vmem:[%s0 + $0x28] sm:$0xf]
    %v36 = vld [vmem:[%s0 + $0x2c] sm:$0xf]
    %v37 = vld [vmem:[%s0 + $0x30] sm:$0xf]
    %v38 = vld [vmem:[%s0 + $0x34] sm:$0xf]
    %v39 = vld [vmem:[%s0 + $0x38] sm:$0xf]
    %v40 = vld [vmem:[%s0 + $0x3c] sm:$0xf]
    %v41 = vld [vmem:[%s0 + $0x40] sm:$0xf]
    %v42 = vld [vmem:[%s0 + $0x44] sm:$0xf]
    %v43 = vld [vmem:[%s0 + $0x48] sm:$0xf]
    %v44 = vld [vmem:[%s0 + $0x4c] sm:$0xf]
    %v45 = vld [vmem:[%s0 + $0x50] sm:$0xf]
    %v46 = vld [vmem:[%s0 + $0x54] sm:$0xf]
    %v47 = vld [vmem:[%s0 + $0x58] sm:$0xf]
    %v48 = vld [vmem:[%s0 + $0x5c] sm:$0xf]
    %v49 = vld [vmem:[%s0 + $0x60] sm:$0xf]
    %v50 = vld [vmem:[%s0 + $0x64] sm:$0xf]
    %v51 = vld [vmem:[%s0 + $0x68] sm:$0xf]
    %v52 = vld [vmem:[%s0 + $0x6c] sm:$0xf]
    %v53 = vld [vmem:[%s0 + $0x70] sm:$0xf]
    %v54 = vld [vmem:[%s0 + $0x74] sm:$0xf]
    %v55 = vld [vmem:[%s0 + $0x78] sm:$0xf]
    %v56 = vld [vmem:[%s0 + $0x7c] sm:$0xf]
    %v57 = vld [vmem:[%s0 + $0x80] sm:$0xf]
    %v58 = vld [vmem:[%s0 + $0x84] sm:$0xf]
    %v59 = vld [vmem:[%s0 + $0x88] sm:$0xf]
    %v60 = vld [vmem:[%s0 + $0x8c] sm:$0xf]
    %v61 = vld [vmem:[%s0 + $0x90] sm:$0xf]
    %v62 = vld [vmem:[%s0 + $0x94] sm:$0xf]
    %v63 = vld [vmem:[%s0 + $0x98] sm:$0xf]
    %v64 = vld [vmem:[%s0 + $0x9c] sm:$0xf]
    %v65 = vld [vmem:[%s0 + $0xa0] sm:$0xf]
    %v66 = vld [vmem:[%s0 + $0xa4] sm:$0xf]
    %v67 = vld [vmem:[%s0 + $0xa8] sm:$0xf]
    %v68 = vld [vmem:[%s0 + $0xac] sm:$0xf]
    %v69 = vld [vmem:[%s0 + $0xb0] sm:$0xf]
    %v70 = vld [vmem:[%s0 + $0xb4] sm:$0xf]
    %v71 = vld [vmem:[%s0 + $0xb8] sm:$0xf]
    %v72 = vld [vmem:[%s0 + $0xbc] sm:$0xf]
    %v73 = vld [vmem:[%s0 + $0xc0] sm:$0xf]
    %v74 = vld [vmem:[%s0 + $0xc4] sm:$0xf]
    %v75 = vld [vmem:[%s0 + $0xc8] sm:$0xf]
    %v76 = vld [vmem:[%s0 + $0xcc] sm:$0xf]
    %v77 = vld [vmem:[%s0 + $0xd0] sm:$0xf]
    %v78 = vld [vmem:[%s0 + $0xd4] sm:$0xf]
    %v79 = vld [vmem:[%s0 + $0xd8] sm:$0xf]
    %v80 = vld [vmem:[%s0 + $0xdc] sm:$0xf]
    %v81 = vld [vmem:[%s0 + $0xe0] sm:$0xf]
    %v82 = vld [vmem:[%s0 + $0xe4] sm:$0xf]
    %v83 = vld [vmem:[%s0 + $0xe8] sm:$0xf]
    %v84 = vld [vmem:[%s0 + $0xec] sm:$0xf]
    %v85 = vld [vmem:[%s0 + $0xf0] sm:$0xf]
    %v86 = vld [vmem:[%s0 + $0xf4] sm:$0xf]
    %v87 = vld [vmem:[%s0 + $0xf8] sm:$0xf]
    %v88 = vld [vmem:[%s0 + $0xfc] sm:$0xf]
    %v89 = vld [vmem:[%s1] sm:$0xf]
    %v90 = vld [vmem:[%s1 + $0x4] sm:$0xf]
    %v91 = vld [vmem:[%s1 + $0x8] sm:$0xf]
    %v92 = vld [vmem:[%s1 + $0xc] sm:$0xf]
    %v93 = vld [vmem:[%s5] sm:$0x1]
    %v95 = vlaneseq
    %v96 = vshrl.u32 %v95, 7
    %v97 = vsub.s32 0, %v96
    %v98 = vrot.slane %v93, %v97
    %v164 = vunpack.c.l.b16 %v25
    %v165 = vunpack.c.l.b16 %v26
    %v166 = vunpack.c.l.b16 %v27
    %v167 = vunpack.c.l.b16 %v28
    %v168 = vunpack.c.l.b16 %v29
    %v169 = vunpack.c.l.b16 %v30
    %v170 = vunpack.c.l.b16 %v31
    %v171 = vunpack.c.l.b16 %v32
    %v172 = vunpack.c.l.b16 %v33
    %v173 = vunpack.c.l.b16 %v34
    %v174 = vunpack.c.l.b16 %v35
    %v175 = vunpack.c.l.b16 %v36
    %v176 = vunpack.c.l.b16 %v37
    %v177 = vunpack.c.l.b16 %v38
    %v178 = vunpack.c.l.b16 %v39
    %v179 = vunpack.c.l.b16 %v40
    %v180 = vunpack.c.l.b16 %v41
    %v181 = vunpack.c.l.b16 %v42
    %v182 = vunpack.c.l.b16 %v43
    %v183 = vunpack.c.l.b16 %v44
    %v184 = vunpack.c.l.b16 %v45
    %v185 = vunpack.c.l.b16 %v46
    %v186 = vunpack.c.l.b16 %v47
    %v187 = vunpack.c.l.b16 %v48
    %v188 = vunpack.c.l.b16 %v49
    %v189 = vunpack.c.l.b16 %v50
    %v190 = vunpack.c.l.b16 %v51
    %v191 = vunpack.c.l.b16 %v52
    %v192 = vunpack.c.l.b16 %v53
    %v193 = vunpack.c.l.b16 %v54
    %v194 = vunpack.c.l.b16 %v55
    %v195 = vunpack.c.l.b16 %v56
    %v196 = vunpack.c.l.b16 %v57
    %v197 = vunpack.c.l.b16 %v58
    %v198 = vunpack.c.l.b16 %v59
    %v199 = vunpack.c.l.b16 %v60
    %v200 = vunpack.c.l.b16 %v61
    %v201 = vunpack.c.l.b16 %v62
    %v202 = vunpack.c.l.b16 %v63
    %v203 = vunpack.c.l.b16 %v64
    %v204 = vunpack.c.l.b16 %v65
    %v205 = vunpack.c.l.b16 %v66
    %v206 = vunpack.c.l.b16 %v67
    %v207 = vunpack.c.l.b16 %v68
    %v208 = vunpack.c.l.b16 %v69
    %v209 = vunpack.c.l.b16 %v70
    %v210 = vunpack.c.l.b16 %v71
    %v211 = vunpack.c.l.b16 %v72
    %v212 = vunpack.c.l.b16 %v73
    %v213 = vunpack.c.l.b16 %v74
    %v214 = vunpack.c.l.b16 %v75
    %v215 = vunpack.c.l.b16 %v76
    %v216 = vunpack.c.l.b16 %v77
    %v217 = vunpack.c.l.b16 %v78
    %v218 = vunpack.c.l.b16 %v79
    %v219 = vunpack.c.l.b16 %v80
    %v220 = vunpack.c.l.b16 %v81
    %v221 = vunpack.c.l.b16 %v82
    %v222 = vunpack.c.l.b16 %v83
    %v223 = vunpack.c.l.b16 %v84
    %v224 = vunpack.c.l.b16 %v85
    %v225 = vunpack.c.l.b16 %v86
    %v226 = vunpack.c.l.b16 %v87
    %v227 = vunpack.c.l.b16 %v88
    %v228 = vpack.c.b16 %v165, %v164
    %v229 = vpack.c.b16 %v167, %v166
    %v230 = vpack.c.b16 %v169, %v168
    %v231 = vpack.c.b16 %v171, %v170
    %v232 = vpack.c.b16 %v173, %v172
    %v233 = vpack.c.b16 %v175, %v174
    %v234 = vpack.c.b16 %v177, %v176
    %v235 = vpack.c.b16 %v179, %v178
    %v236 = vpack.c.b16 %v181, %v180
    %v237 = vpack.c.b16 %v183, %v182
    %v238 = vpack.c.b16 %v185, %v184
    %v239 = vpack.c.b16 %v187, %v186
    %v240 = vpack.c.b16 %v189, %v188
    %v241 = vpack.c.b16 %v191, %v190
    %v242 = vpack.c.b16 %v193, %v192
    %v243 = vpack.c.b16 %v195, %v194
    %v244 = vpack.c.b16 %v197, %v196
    %v245 = vpack.c.b16 %v199, %v198
    %v246 = vpack.c.b16 %v201, %v200
    %v247 = vpack.c.b16 %v203, %v202
    %v248 = vpack.c.b16 %v205, %v204
    %v249 = vpack.c.b16 %v207, %v206
    %v250 = vpack.c.b16 %v209, %v208
    %v251 = vpack.c.b16 %v211, %v210
    %v252 = vpack.c.b16 %v213, %v212
    %v253 = vpack.c.b16 %v215, %v214
    %v254 = vpack.c.b16 %v217, %v216
    %v255 = vpack.c.b16 %v219, %v218
    %v256 = vpack.c.b16 %v221, %v220
    %v257 = vpack.c.b16 %v223, %v222
    %v258 = vpack.c.b16 %v225, %v224
    %v259 = vpack.c.b16 %v227, %v226
    %v264 = vunpack.c.l.b16 %v89
    %v265 = vunpack.c.l.b16 %v90
    %v266 = vunpack.c.l.b16 %v91
    %v267 = vunpack.c.l.b16 %v92
    %v268 = vpack.c.b16 %v265, %v264
    %v269 = vpack.c.b16 %v267, %v266
    %vm272 = vcmask 261120
    %v274 = vsel %vm272, %v228, 0
    %v277 = vsel %vm272, %v229, 0
    %v280 = vsel %vm272, %v230, 0
    %v283 = vsel %vm272, %v231, 0
    %v286 = vsel %vm272, %v232, 0
    %v289 = vsel %vm272, %v233, 0
    %v292 = vsel %vm272, %v234, 0
    %v295 = vsel %vm272, %v235, 0
    %v298 = vsel %vm272, %v236, 0
    %v301 = vsel %vm272, %v237, 0
    %v304 = vsel %vm272, %v238, 0
    %v307 = vsel %vm272, %v239, 0
    %v310 = vsel %vm272, %v240, 0
    %v313 = vsel %vm272, %v241, 0
    %v316 = vsel %vm272, %v242, 0
    %v319 = vsel %vm272, %v243, 0
    %v322 = vsel %vm272, %v244, 0
    %v325 = vsel %vm272, %v245, 0
    %v328 = vsel %vm272, %v246, 0
    %v331 = vsel %vm272, %v247, 0
    %v334 = vsel %vm272, %v248, 0
    %v337 = vsel %vm272, %v249, 0
    %v340 = vsel %vm272, %v250, 0
    %v343 = vsel %vm272, %v251, 0
    %v346 = vsel %vm272, %v252, 0
    %v349 = vsel %vm272, %v253, 0
    %v352 = vsel %vm272, %v254, 0
    %v355 = vsel %vm272, %v255, 0
    %v358 = vsel %vm272, %v256, 0
    %v361 = vsel %vm272, %v257, 0
    %v364 = vsel %vm272, %v258, 0
    %v367 = vsel %vm272, %v259, 0
    %369 = vmatprep.subr.bf16.mxu0 0
    %370 = vmatpush1.bf16.msra.mxu0 %v268
    %371 = vmatprep.subr.bf16.mxu0 0
    %372 = vmatpush1.bf16.msra.mxu0 %v269
    %373 = vmatprep.subr.bf16.mxu0 0
    %374 = vmatpush1.bf16.msra.mxu0 0
    %375 = vmatprep.subr.bf16.mxu0 0
    %376 = vmatpush1.bf16.msra.mxu0 0
    %377 = vmatprep.subr.bf16.mxu0 0
    %378 = vmatpush1.bf16.msra.mxu0 0
    %379 = vmatprep.subr.bf16.mxu0 0
    %380 = vmatpush1.bf16.msra.mxu0 0
    %381 = vmatprep.subr.bf16.mxu0 0
    %382 = vmatpush1.bf16.msra.mxu0 0
    %383 = vmatprep.subr.bf16.mxu0 0
    %384 = vmatpush1.bf16.msra.mxu0 0
    %385 = vmatprep.subr.bf16.mxu0 0
    %386 = vmatpush1.bf16.msra.mxu0 0
    %387 = vmatprep.subr.bf16.mxu0 0
    %388 = vmatpush1.bf16.msra.mxu0 0
    %389 = vmatprep.subr.bf16.mxu0 0
    %390 = vmatpush1.bf16.msra.mxu0 0
    %391 = vmatprep.subr.bf16.mxu0 0
    %392 = vmatpush1.bf16.msra.mxu0 0
    %393 = vmatprep.subr.bf16.mxu0 0
    %394 = vmatpush1.bf16.msra.mxu0 0
    %395 = vmatprep.subr.bf16.mxu0 0
    %396 = vmatpush1.bf16.msra.mxu0 0
    %397 = vmatprep.subr.bf16.mxu0 0
    %398 = vmatpush1.bf16.msra.mxu0 0
    %399 = vmatprep.subr.bf16.mxu0 0
    %400 = vmatpush1.bf16.msra.mxu0 0
    %401 = vmatprep.mubr.bf16.mxu0 0
    %402 = vmatmul.mubr.bf16.gmra.mrb[0].mxu0 %v274
    %v403 = vpop.f32.mrb[0].mxu0
    %v404 = vadd.f32 %v98, %v403
    %v405 = vpop.f32.mrb[0].mxu0
    %v406 = vpop.f32.mrb[0].mxu0
    %v407 = vadd.f32 %v98, %v406
    %v408 = vpop.f32.mrb[0].mxu0
    %409 = vmatprep.mubr.bf16.mxu0 0
    %410 = vmatmul.mubr.bf16.gmra.mrb[0].mxu0 %v277
    %v411 = vpop.f32.mrb[0].mxu0
    %v412 = vadd.f32 %v98, %v411
    %v413 = vpop.f32.mrb[0].mxu0
    %v414 = vpop.f32.mrb[0].mxu0
    %v415 = vadd.f32 %v98, %v414
    %v416 = vpop.f32.mrb[0].mxu0
    %417 = vmatprep.mubr.bf16.mxu0 0
    %418 = vmatmul.mubr.bf16.gmra.mrb[0].mxu0 %v280
    %v419 = vpop.f32.mrb[0].mxu0
    %v420 = vadd.f32 %v98, %v419
    %v421 = vpop.f32.mrb[0].mxu0
    %v422 = vpop.f32.mrb[0].mxu0
    %v423 = vadd.f32 %v98, %v422
    %v424 = vpop.f32.mrb[0].mxu0
    %425 = vmatprep.mubr.bf16.mxu0 0
    %426 = vmatmul.mubr.bf16.gmra.mrb[0].mxu0 %v283
    %v427 = vpop.f32.mrb[0].mxu0
    %v428 = vadd.f32 %v98, %v427
    %v429 = vpop.f32.mrb[0].mxu0
    %v430 = vpop.f32.mrb[0].mxu0
    %v431 = vadd.f32 %v98, %v430
    %v432 = vpop.f32.mrb[0].mxu0
    %433 = vmatprep.mubr.bf16.mxu0 0
    %434 = vmatmul.mubr.bf16.gmra.mrb[0].mxu0 %v286
    %v435 = vpop.f32.mrb[0].mxu0
    %v436 = vadd.f32 %v98, %v435
    %v437 = vpop.f32.mrb[0].mxu0
    %v438 = vpop.f32.mrb[0].mxu0
    %v439 = vadd.f32 %v98, %v438
    %v440 = vpop.f32.mrb[0].mxu0
    %441 = vmatprep.mubr.bf16.mxu0 0
    %442 = vmatmul.mubr.bf16.gmra.mrb[0].mxu0 %v289
    %v443 = vpop.f32.mrb[0].mxu0
    %v444 = vadd.f32 %v98, %v443
    %v445 = vpop.f32.mrb[0].mxu0
    %v446 = vpop.f32.mrb[0].mxu0
    %v447 = vadd.f32 %v98, %v446
    %v448 = vpop.f32.mrb[0].mxu0
    %449 = vmatprep.mubr.bf16.mxu0 0
    %450 = vmatmul.mubr.bf16.gmra.mrb[0].mxu0 %v292
    %v451 = vpop.f32.mrb[0].mxu0
    %v452 = vadd.f32 %v98, %v451
    %v453 = vpop.f32.mrb[0].mxu0
    %v454 = vpop.f32.mrb[0].mxu0
    %v455 = vadd.f32 %v98, %v454
    %v456 = vpop.f32.mrb[0].mxu0
    %457 = vmatprep.mubr.bf16.mxu0 0
    %458 = vmatmul.mubr.bf16.gmra.mrb[0].mxu0 %v295
    %v459 = vpop.f32.mrb[0].mxu0
    %v460 = vadd.f32 %v98, %v459
    %v461 = vpop.f32.mrb[0].mxu0
    %v462 = vpop.f32.mrb[0].mxu0
    %v463 = vadd.f32 %v98, %v462
    %v464 = vpop.f32.mrb[0].mxu0
    %465 = vmatprep.mubr.bf16.mxu0 0
    %466 = vmatmul.mubr.bf16.gmra.mrb[0].mxu0 %v298
    %v467 = vpop.f32.mrb[0].mxu0
    %v468 = vadd.f32 %v98, %v467
    %v469 = vpop.f32.mrb[0].mxu0
    %v470 = vpop.f32.mrb[0].mxu0
    %v471 = vadd.f32 %v98, %v470
    %v472 = vpop.f32.mrb[0].mxu0
    %473 = vmatprep.mubr.bf16.mxu0 0
    %474 = vmatmul.mubr.bf16.gmra.mrb[0].mxu0 %v301
    %v475 = vpop.f32.mrb[0].mxu0
    %v476 = vadd.f32 %v98, %v475
    %v477 = vpop.f32.mrb[0].mxu0
    %v478 = vpop.f32.mrb[0].mxu0
    %v479 = vadd.f32 %v98, %v478
    %v480 = vpop.f32.mrb[0].mxu0
    %481 = vmatprep.mubr.bf16.mxu0 0
    %482 = vmatmul.mubr.bf16.gmra.mrb[0].mxu0 %v304
    %v483 = vpop.f32.mrb[0].mxu0
    %v484 = vadd.f32 %v98, %v483
    %v485 = vpop.f32.mrb[0].mxu0
    %v486 = vpop.f32.mrb[0].mxu0
    %v487 = vadd.f32 %v98, %v486
    %v488 = vpop.f32.mrb[0].mxu0
    %489 = vmatprep.mubr.bf16.mxu0 0
    %490 = vmatmul.mubr.bf16.gmra.mrb[0].mxu0 %v307
    %v491 = vpop.f32.mrb[0].mxu0
    %v492 = vadd.f32 %v98, %v491
    %v493 = vpop.f32.mrb[0].mxu0
    %v494 = vpop.f32.mrb[0].mxu0
    %v495 = vadd.f32 %v98, %v494
    %v496 = vpop.f32.mrb[0].mxu0
    %497 = vmatprep.mubr.bf16.mxu0 0
    %498 = vmatmul.mubr.bf16.gmra.mrb[0].mxu0 %v310
    %v499 = vpop.f32.mrb[0].mxu0
    %v500 = vadd.f32 %v98, %v499
    %v501 = vpop.f32.mrb[0].mxu0
    %v502 = vpop.f32.mrb[0].mxu0
    %v503 = vadd.f32 %v98, %v502
    %v504 = vpop.f32.mrb[0].mxu0
    %505 = vmatprep.mubr.bf16.mxu0 0
    %506 = vmatmul.mubr.bf16.gmra.mrb[0].mxu0 %v313
    %v507 = vpop.f32.mrb[0].mxu0
    %v508 = vadd.f32 %v98, %v507
    %v509 = vpop.f32.mrb[0].mxu0
    %v510 = vpop.f32.mrb[0].mxu0
    %v511 = vadd.f32 %v98, %v510
    %v512 = vpop.f32.mrb[0].mxu0
    %513 = vmatprep.mubr.bf16.mxu0 0
    %514 = vmatmul.mubr.bf16.gmra.mrb[0].mxu0 %v316
    %v515 = vpop.f32.mrb[0].mxu0
    %v516 = vadd.f32 %v98, %v515
    %v517 = vpop.f32.mrb[0].mxu0
    %v518 = vpop.f32.mrb[0].mxu0
    %v519 = vadd.f32 %v98, %v518
    %v520 = vpop.f32.mrb[0].mxu0
    %521 = vmatprep.mubr.bf16.mxu0 0
    %522 = vmatmul.mubr.bf16.gmra.mrb[0].mxu0 %v319
    %v523 = vpop.f32.mrb[0].mxu0
    %v524 = vadd.f32 %v98, %v523
    %v525 = vpop.f32.mrb[0].mxu0
    %v526 = vpop.f32.mrb[0].mxu0
    %v527 = vadd.f32 %v98, %v526
    %v528 = vpop.f32.mrb[0].mxu0
    %529 = vmatprep.mubr.bf16.mxu0 0
    %530 = vmatmul.mubr.bf16.gmra.mrb[0].mxu0 %v322
    %v531 = vpop.f32.mrb[0].mxu0
    %v532 = vadd.f32 %v98, %v531
    %v533 = vpop.f32.mrb[0].mxu0
    %v534 = vpop.f32.mrb[0].mxu0
    %v535 = vadd.f32 %v98, %v534
    %v536 = vpop.f32.mrb[0].mxu0
    %537 = vmatprep.mubr.bf16.mxu0 0
    %538 = vmatmul.mubr.bf16.gmra.mrb[0].mxu0 %v325
    %v539 = vpop.f32.mrb[0].mxu0
    %v540 = vadd.f32 %v98, %v539
    %v541 = vpop.f32.mrb[0].mxu0
    %v542 = vpop.f32.mrb[0].mxu0
    %v543 = vadd.f32 %v98, %v542
    %v544 = vpop.f32.mrb[0].mxu0
    %545 = vmatprep.mubr.bf16.mxu0 0
    %546 = vmatmul.mubr.bf16.gmra.mrb[0].mxu0 %v328
    %v547 = vpop.f32.mrb[0].mxu0
    %v548 = vadd.f32 %v98, %v547
    %v549 = vpop.f32.mrb[0].mxu0
    %v550 = vpop.f32.mrb[0].mxu0
    %v551 = vadd.f32 %v98, %v550
    %v552 = vpop.f32.mrb[0].mxu0
    %553 = vmatprep.mubr.bf16.mxu0 0
    %554 = vmatmul.mubr.bf16.gmra.mrb[0].mxu0 %v331
    %v555 = vpop.f32.mrb[0].mxu0
    %v556 = vadd.f32 %v98, %v555
    %v557 = vpop.f32.mrb[0].mxu0
    %v558 = vpop.f32.mrb[0].mxu0
    %v559 = vadd.f32 %v98, %v558
    %v560 = vpop.f32.mrb[0].mxu0
    %561 = vmatprep.mubr.bf16.mxu0 0
    %562 = vmatmul.mubr.bf16.gmra.mrb[0].mxu0 %v334
    %v563 = vpop.f32.mrb[0].mxu0
    %v564 = vadd.f32 %v98, %v563
    %v565 = vpop.f32.mrb[0].mxu0
    %v566 = vpop.f32.mrb[0].mxu0
    %v567 = vadd.f32 %v98, %v566
    %v568 = vpop.f32.mrb[0].mxu0
    %569 = vmatprep.mubr.bf16.mxu0 0
    %570 = vmatmul.mubr.bf16.gmra.mrb[0].mxu0 %v337
    %v571 = vpop.f32.mrb[0].mxu0
    %v572 = vadd.f32 %v98, %v571
    %v573 = vpop.f32.mrb[0].mxu0
    %v574 = vpop.f32.mrb[0].mxu0
    %v575 = vadd.f32 %v98, %v574
    %v576 = vpop.f32.mrb[0].mxu0
    %577 = vmatprep.mubr.bf16.mxu0 0
    %578 = vmatmul.mubr.bf16.gmra.mrb[0].mxu0 %v340
    %v579 = vpop.f32.mrb[0].mxu0
    %v580 = vadd.f32 %v98, %v579
    %v581 = vpop.f32.mrb[0].mxu0
    %v582 = vpop.f32.mrb[0].mxu0
    %v583 = vadd.f32 %v98, %v582
    %v584 = vpop.f32.mrb[0].mxu0
    %585 = vmatprep.mubr.bf16.mxu0 0
    %586 = vmatmul.mubr.bf16.gmra.mrb[0].mxu0 %v343
    %v587 = vpop.f32.mrb[0].mxu0
    %v588 = vadd.f32 %v98, %v587
    %v589 = vpop.f32.mrb[0].mxu0
    %v590 = vpop.f32.mrb[0].mxu0
    %v591 = vadd.f32 %v98, %v590
    %v592 = vpop.f32.mrb[0].mxu0
    %593 = vmatprep.mubr.bf16.mxu0 0
    %594 = vmatmul.mubr.bf16.gmra.mrb[0].mxu0 %v346
    %v595 = vpop.f32.mrb[0].mxu0
    %v596 = vadd.f32 %v98, %v595
    %v597 = vpop.f32.mrb[0].mxu0
    %v598 = vpop.f32.mrb[0].mxu0
    %v599 = vadd.f32 %v98, %v598
    %v600 = vpop.f32.mrb[0].mxu0
    %601 = vmatprep.mubr.bf16.mxu0 0
    %602 = vmatmul.mubr.bf16.gmra.mrb[0].mxu0 %v349
    %v603 = vpop.f32.mrb[0].mxu0
    %v604 = vadd.f32 %v98, %v603
    %v605 = vpop.f32.mrb[0].mxu0
    %v606 = vpop.f32.mrb[0].mxu0
    %v607 = vadd.f32 %v98, %v606
    %v608 = vpop.f32.mrb[0].mxu0
    %609 = vmatprep.mubr.bf16.mxu0 0
    %610 = vmatmul.mubr.bf16.gmra.mrb[0].mxu0 %v352
    %v611 = vpop.f32.mrb[0].mxu0
    %v612 = vadd.f32 %v98, %v611
    %v613 = vpop.f32.mrb[0].mxu0
    %v614 = vpop.f32.mrb[0].mxu0
    %v615 = vadd.f32 %v98, %v614
    %v616 = vpop.f32.mrb[0].mxu0
    %617 = vmatprep.mubr.bf16.mxu0 0
    %618 = vmatmul.mubr.bf16.gmra.mrb[0].mxu0 %v355
    %v619 = vpop.f32.mrb[0].mxu0
    %v620 = vadd.f32 %v98, %v619
    %v621 = vpop.f32.mrb[0].mxu0
    %v622 = vpop.f32.mrb[0].mxu0
    %v623 = vadd.f32 %v98, %v622
    %v624 = vpop.f32.mrb[0].mxu0
    %625 = vmatprep.mubr.bf16.mxu0 0
    %626 = vmatmul.mubr.bf16.gmra.mrb[0].mxu0 %v358
    %v627 = vpop.f32.mrb[0].mxu0
    %v628 = vadd.f32 %v98, %v627
    %v629 = vpop.f32.mrb[0].mxu0
    %v630 = vpop.f32.mrb[0].mxu0
    %v631 = vadd.f32 %v98, %v630
    %v632 = vpop.f32.mrb[0].mxu0
    %633 = vmatprep.mubr.bf16.mxu0 0
    %634 = vmatmul.mubr.bf16.gmra.mrb[0].mxu0 %v361
    %v635 = vpop.f32.mrb[0].mxu0
    %v636 = vadd.f32 %v98, %v635
    %v637 = vpop.f32.mrb[0].mxu0
    %v638 = vpop.f32.mrb[0].mxu0
    %v639 = vadd.f32 %v98, %v638
    %v640 = vpop.f32.mrb[0].mxu0
    %641 = vmatprep.mubr.bf16.mxu0 0
    %642 = vmatmul.mubr.bf16.gmra.mrb[0].mxu0 %v364
    %v643 = vpop.f32.mrb[0].mxu0
    %v644 = vadd.f32 %v98, %v643
    %v645 = vpop.f32.mrb[0].mxu0
    %v646 = vpop.f32.mrb[0].mxu0
    %v647 = vadd.f32 %v98, %v646
    %v648 = vpop.f32.mrb[0].mxu0
    %649 = vmatprep.mubr.bf16.mxu0 0
    %650 = vmatmul.mubr.bf16.gmra.mrb[0].mxu0 %v367
    %v651 = vpop.f32.mrb[0].mxu0
    %v652 = vadd.f32 %v98, %v651
    %v653 = vpop.f32.mrb[0].mxu0
    %v654 = vpop.f32.mrb[0].mxu0
    %v655 = vadd.f32 %v98, %v654
    %v656 = vpop.f32.mrb[0].mxu0
    %657 = vdwg.mxu0
    %v658 = vmax.f32 %v404, 0.0
    %v659 = vmax.f32 %v407, 0.0
    %v660 = vmax.f32 %v412, 0.0
    %v661 = vmax.f32 %v415, 0.0
    %v662 = vmax.f32 %v420, 0.0
    %v663 = vmax.f32 %v423, 0.0
    %v664 = vmax.f32 %v428, 0.0
    %v665 = vmax.f32 %v431, 0.0
    %v666 = vmax.f32 %v436, 0.0
    %v667 = vmax.f32 %v439, 0.0
    %v668 = vmax.f32 %v444, 0.0
    %v669 = vmax.f32 %v447, 0.0
    %v670 = vmax.f32 %v452, 0.0
    %v671 = vmax.f32 %v455, 0.0
    %v672 = vmax.f32 %v460, 0.0
    %v673 = vmax.f32 %v463, 0.0
    %v674 = vmax.f32 %v468, 0.0
    %v675 = vmax.f32 %v471, 0.0
    %v676 = vmax.f32 %v476, 0.0
    %v677 = vmax.f32 %v479, 0.0
    %v678 = vmax.f32 %v484, 0.0
    %v679 = vmax.f32 %v487, 0.0
    %v680 = vmax.f32 %v492, 0.0
    %v681 = vmax.f32 %v495, 0.0
    %v682 = vmax.f32 %v500, 0.0
    %v683 = vmax.f32 %v503, 0.0
    %v684 = vmax.f32 %v508, 0.0
    %v685 = vmax.f32 %v511, 0.0
    %v686 = vmax.f32 %v516, 0.0
    %v687 = vmax.f32 %v519, 0.0
    %v688 = vmax.f32 %v524, 0.0
    %v689 = vmax.f32 %v527, 0.0
    %v690 = vmax.f32 %v532, 0.0
    %v691 = vmax.f32 %v535, 0.0
    %v692 = vmax.f32 %v540, 0.0
    %v693 = vmax.f32 %v543, 0.0
    %v694 = vmax.f32 %v548, 0.0
    %v695 = vmax.f32 %v551, 0.0
    %v696 = vmax.f32 %v556, 0.0
    %v697 = vmax.f32 %v559, 0.0
    %v698 = vmax.f32 %v564, 0.0
    %v699 = vmax.f32 %v567, 0.0
    %v700 = vmax.f32 %v572, 0.0
    %v701 = vmax.f32 %v575, 0.0
    %v702 = vmax.f32 %v580, 0.0
    %v703 = vmax.f32 %v583, 0.0
    %v704 = vmax.f32 %v588, 0.0
    %v705 = vmax.f32 %v591, 0.0
    %v706 = vmax.f32 %v596, 0.0
    %v707 = vmax.f32 %v599, 0.0
    %v708 = vmax.f32 %v604, 0.0
    %v709 = vmax.f32 %v607, 0.0
    %v710 = vmax.f32 %v612, 0.0
    %v711 = vmax.f32 %v615, 0.0
    %v712 = vmax.f32 %v620, 0.0
    %v713 = vmax.f32 %v623, 0.0
    %v714 = vmax.f32 %v628, 0.0
    %v715 = vmax.f32 %v631, 0.0
    %v716 = vmax.f32 %v636, 0.0
    %v717 = vmax.f32 %v639, 0.0
    %v718 = vmax.f32 %v644, 0.0
    %v719 = vmax.f32 %v647, 0.0
    %v720 = vmax.f32 %v652, 0.0
    %v721 = vmax.f32 %v655, 0.0
    %v722 = vpack.c.bf16 %v659, %v658
    %v723 = vpack.c.bf16 %v661, %v660
    %v724 = vpack.c.bf16 %v663, %v662
    %v725 = vpack.c.bf16 %v665, %v664
    %v726 = vpack.c.bf16 %v667, %v666
    %v727 = vpack.c.bf16 %v669, %v668
    %v728 = vpack.c.bf16 %v671, %v670
    %v729 = vpack.c.bf16 %v673, %v672
    %v730 = vpack.c.bf16 %v675, %v674
    %v731 = vpack.c.bf16 %v677, %v676
    %v732 = vpack.c.bf16 %v679, %v678
    %v733 = vpack.c.bf16 %v681, %v680
    %v734 = vpack.c.bf16 %v683, %v682
    %v735 = vpack.c.bf16 %v685, %v684
    %v736 = vpack.c.bf16 %v687, %v686
    %v737 = vpack.c.bf16 %v689, %v688
    %v738 = vpack.c.bf16 %v691, %v690
    %v739 = vpack.c.bf16 %v693, %v692
    %v740 = vpack.c.bf16 %v695, %v694
    %v741 = vpack.c.bf16 %v697, %v696
    %v742 = vpack.c.bf16 %v699, %v698
    %v743 = vpack.c.bf16 %v701, %v700
    %v744 = vpack.c.bf16 %v703, %v702
    %v745 = vpack.c.bf16 %v705, %v704
    %v746 = vpack.c.bf16 %v707, %v706
    %v747 = vpack.c.bf16 %v709, %v708
    %v748 = vpack.c.bf16 %v711, %v710
    %v749 = vpack.c.bf16 %v713, %v712
    %v750 = vpack.c.bf16 %v715, %v714
    %v751 = vpack.c.bf16 %v717, %v716
    %v752 = vpack.c.bf16 %v719, %v718
    %v753 = vpack.c.bf16 %v721, %v720
    %v754 = vld [vmem:[%s2] sm:$0xf]
    %v755 = vld [vmem:[%s2 + $0x4] sm:$0xf]
    %v756 = vld [vmem:[%s2 + $0x8] sm:$0xf]
    %v757 = vld [vmem:[%s2 + $0xc] sm:$0xf]
    %v758 = vld [vmem:[%s2 + $0x10] sm:$0xf]
    %v759 = vld [vmem:[%s2 + $0x14] sm:$0xf]
    %v760 = vld [vmem:[%s2 + $0x18] sm:$0xf]
    %v761 = vld [vmem:[%s2 + $0x1c] sm:$0xf]
    %v762 = vld [vmem:[%s2 + $0x20] sm:$0xf]
    %v763 = vld [vmem:[%s2 + $0x24] sm:$0xf]
    %v764 = vld [vmem:[%s2 + $0x28] sm:$0xf]
    %v765 = vld [vmem:[%s2 + $0x2c] sm:$0xf]
    %v766 = vld [vmem:[%s2 + $0x30] sm:$0xf]
    %v767 = vld [vmem:[%s2 + $0x34] sm:$0xf]
    %v768 = vld [vmem:[%s2 + $0x38] sm:$0xf]
    %v769 = vld [vmem:[%s2 + $0x3c] sm:$0xf]
    %v770 = vld [vmem:[%s5 + $0x1] sm:$0x1]
    %v772 = vlaneseq
    %v773 = vshrl.u32 %v772, 7
    %v774 = vsub.s32 0, %v773
    %v775 = vrot.slane %v770, %v774
    %v793 = vunpack.c.l.b16 %v754
    %v794 = vunpack.c.l.b16 %v755
    %v795 = vunpack.c.l.b16 %v756
    %v796 = vunpack.c.l.b16 %v757
    %v797 = vunpack.c.l.b16 %v758
    %v798 = vunpack.c.l.b16 %v759
    %v799 = vunpack.c.l.b16 %v760
    %v800 = vunpack.c.l.b16 %v761
    %v801 = vunpack.c.l.b16 %v762
    %v802 = vunpack.c.l.b16 %v763
    %v803 = vunpack.c.l.b16 %v764
    %v804 = vunpack.c.l.b16 %v765
    %v805 = vunpack.c.l.b16 %v766
    %v806 = vunpack.c.l.b16 %v767
    %v807 = vunpack.c.l.b16 %v768
    %v808 = vunpack.c.l.b16 %v769
    %v809 = vpack.c.b16 %v794, %v793
    %v810 = vpack.c.b16 %v796, %v795
    %v811 = vpack.c.b16 %v798, %v797
    %v812 = vpack.c.b16 %v800, %v799
    %v813 = vpack.c.b16 %v802, %v801
    %v814 = vpack.c.b16 %v804, %v803
    %v815 = vpack.c.b16 %v806, %v805
    %v816 = vpack.c.b16 %v808, %v807
    %825 = vmatprep.subr.bf16.mxu0 0
    %826 = vmatpush1.bf16.msra.mxu0 %v809
    %827 = vmatprep.subr.bf16.mxu0 0
    %828 = vmatpush1.bf16.msra.mxu0 %v810
    %829 = vmatprep.subr.bf16.mxu0 0
    %830 = vmatpush1.bf16.msra.mxu0 %v811
    %831 = vmatprep.subr.bf16.mxu0 0
    %832 = vmatpush1.bf16.msra.mxu0 %v812
    %833 = vmatprep.subr.bf16.mxu0 0
    %834 = vmatpush1.bf16.msra.mxu0 %v813
    %835 = vmatprep.subr.bf16.mxu0 0
    %836 = vmatpush1.bf16.msra.mxu0 %v814
    %837 = vmatprep.subr.bf16.mxu0 0
    %838 = vmatpush1.bf16.msra.mxu0 %v815
    %839 = vmatprep.subr.bf16.mxu0 0
    %840 = vmatpush1.bf16.msra.mxu0 %v816
    %841 = vmatprep.subr.bf16.mxu0 0
    %842 = vmatpush1.bf16.msra.mxu0 0
    %843 = vmatprep.subr.bf16.mxu0 0
    %844 = vmatpush1.bf16.msra.mxu0 0
    %845 = vmatprep.subr.bf16.mxu0 0
    %846 = vmatpush1.bf16.msra.mxu0 0
    %847 = vmatprep.subr.bf16.mxu0 0
    %848 = vmatpush1.bf16.msra.mxu0 0
    %849 = vmatprep.subr.bf16.mxu0 0
    %850 = vmatpush1.bf16.msra.mxu0 0
    %851 = vmatprep.subr.bf16.mxu0 0
    %852 = vmatpush1.bf16.msra.mxu0 0
    %853 = vmatprep.subr.bf16.mxu0 0
    %854 = vmatpush1.bf16.msra.mxu0 0
    %855 = vmatprep.subr.bf16.mxu0 0
    %856 = vmatpush1.bf16.msra.mxu0 0
    %857 = vmatprep.mubr.bf16.mxu0 0
    %858 = vmatmul.mubr.bf16.gmra.mrb[0].mxu0 %v722
    %v859 = vpop.f32.mrb[0].mxu0
    %v860 = vadd.f32 %v775, %v859
    %v861 = vpop.f32.mrb[0].mxu0
    %v862 = vpop.f32.mrb[0].mxu0
    %v863 = vadd.f32 %v775, %v862
    %v864 = vpop.f32.mrb[0].mxu0
    %865 = vmatprep.mubr.bf16.mxu0 0
    %866 = vmatmul.mubr.bf16.gmra.mrb[0].mxu0 %v723
    %v867 = vpop.f32.mrb[0].mxu0
    %v868 = vadd.f32 %v775, %v867
    %v869 = vpop.f32.mrb[0].mxu0
    %v870 = vpop.f32.mrb[0].mxu0
    %v871 = vadd.f32 %v775, %v870
    %v872 = vpop.f32.mrb[0].mxu0
    %873 = vmatprep.mubr.bf16.mxu0 0
    %874 = vmatmul.mubr.bf16.gmra.mrb[0].mxu0 %v724
    %v875 = vpop.f32.mrb[0].mxu0
    %v876 = vadd.f32 %v775, %v875
    %v877 = vpop.f32.mrb[0].mxu0
    %v878 = vpop.f32.mrb[0].mxu0
    %v879 = vadd.f32 %v775, %v878
    %v880 = vpop.f32.mrb[0].mxu0
    %881 = vmatprep.mubr.bf16.mxu0 0
    %882 = vmatmul.mubr.bf16.gmra.mrb[0].mxu0 %v725
    %v883 = vpop.f32.mrb[0].mxu0
    %v884 = vadd.f32 %v775, %v883
    %v885 = vpop.f32.mrb[0].mxu0
    %v886 = vpop.f32.mrb[0].mxu0
    %v887 = vadd.f32 %v775, %v886
    %v888 = vpop.f32.mrb[0].mxu0
    %889 = vmatprep.mubr.bf16.mxu0 0
    %890 = vmatmul.mubr.bf16.gmra.mrb[0].mxu0 %v726
    %v891 = vpop.f32.mrb[0].mxu0
    %v892 = vadd.f32 %v775, %v891
    %v893 = vpop.f32.mrb[0].mxu0
    %v894 = vpop.f32.mrb[0].mxu0
    %v895 = vadd.f32 %v775, %v894
    %v896 = vpop.f32.mrb[0].mxu0
    %897 = vmatprep.mubr.bf16.mxu0 0
    %898 = vmatmul.mubr.bf16.gmra.mrb[0].mxu0 %v727
    %v899 = vpop.f32.mrb[0].mxu0
    %v900 = vadd.f32 %v775, %v899
    %v901 = vpop.f32.mrb[0].mxu0
    %v902 = vpop.f32.mrb[0].mxu0
    %v903 = vadd.f32 %v775, %v902
    %v904 = vpop.f32.mrb[0].mxu0
    %905 = vmatprep.mubr.bf16.mxu0 0
    %906 = vmatmul.mubr.bf16.gmra.mrb[0].mxu0 %v728
    %v907 = vpop.f32.mrb[0].mxu0
    %v908 = vadd.f32 %v775, %v907
    %v909 = vpop.f32.mrb[0].mxu0
    %v910 = vpop.f32.mrb[0].mxu0
    %v911 = vadd.f32 %v775, %v910
    %v912 = vpop.f32.mrb[0].mxu0
    %913 = vmatprep.mubr.bf16.mxu0 0
    %914 = vmatmul.mubr.bf16.gmra.mrb[0].mxu0 %v729
    %v915 = vpop.f32.mrb[0].mxu0
    %v916 = vadd.f32 %v775, %v915
    %v917 = vpop.f32.mrb[0].mxu0
    %v918 = vpop.f32.mrb[0].mxu0
    %v919 = vadd.f32 %v775, %v918
    %v920 = vpop.f32.mrb[0].mxu0
    %921 = vmatprep.mubr.bf16.mxu0 0
    %922 = vmatmul.mubr.bf16.gmra.mrb[0].mxu0 %v730
    %v923 = vpop.f32.mrb[0].mxu0
    %v924 = vadd.f32 %v775, %v923
    %v925 = vpop.f32.mrb[0].mxu0
    %v926 = vpop.f32.mrb[0].mxu0
    %v927 = vadd.f32 %v775, %v926
    %v928 = vpop.f32.mrb[0].mxu0
    %929 = vmatprep.mubr.bf16.mxu0 0
    %930 = vmatmul.mubr.bf16.gmra.mrb[0].mxu0 %v731
    %v931 = vpop.f32.mrb[0].mxu0
    %v932 = vadd.f32 %v775, %v931
    %v933 = vpop.f32.mrb[0].mxu0
    %v934 = vpop.f32.mrb[0].mxu0
    %v935 = vadd.f32 %v775, %v934
    %v936 = vpop.f32.mrb[0].mxu0
    %937 = vmatprep.mubr.bf16.mxu0 0
    %938 = vmatmul.mubr.bf16.gmra.mrb[0].mxu0 %v732
    %v939 = vpop.f32.mrb[0].mxu0
    %v940 = vadd.f32 %v775, %v939
    %v941 = vpop.f32.mrb[0].mxu0
    %v942 = vpop.f32.mrb[0].mxu0
    %v943 = vadd.f32 %v775, %v942
    %v944 = vpop.f32.mrb[0].mxu0
    %945 = vmatprep.mubr.bf16.mxu0 0
    %946 = vmatmul.mubr.bf16.gmra.mrb[0].mxu0 %v733
    %v947 = vpop.f32.mrb[0].mxu0
    %v948 = vadd.f32 %v775, %v947
    %v949 = vpop.f32.mrb[0].mxu0
    %v950 = vpop.f32.mrb[0].mxu0
    %v951 = vadd.f32 %v775, %v950
    %v952 = vpop.f32.mrb[0].mxu0
    %953 = vmatprep.mubr.bf16.mxu0 0
    %954 = vmatmul.mubr.bf16.gmra.mrb[0].mxu0 %v734
    %v955 = vpop.f32.mrb[0].mxu0
    %v956 = vadd.f32 %v775, %v955
    %v957 = vpop.f32.mrb[0].mxu0
    %v958 = vpop.f32.mrb[0].mxu0
    %v959 = vadd.f32 %v775, %v958
    %v960 = vpop.f32.mrb[0].mxu0
    %961 = vmatprep.mubr.bf16.mxu0 0
    %962 = vmatmul.mubr.bf16.gmra.mrb[0].mxu0 %v735
    %v963 = vpop.f32.mrb[0].mxu0
    %v964 = vadd.f32 %v775, %v963
    %v965 = vpop.f32.mrb[0].mxu0
    %v966 = vpop.f32.mrb[0].mxu0
    %v967 = vadd.f32 %v775, %v966
    %v968 = vpop.f32.mrb[0].mxu0
    %969 = vmatprep.mubr.bf16.mxu0 0
    %970 = vmatmul.mubr.bf16.gmra.mrb[0].mxu0 %v736
    %v971 = vpop.f32.mrb[0].mxu0
    %v972 = vadd.f32 %v775, %v971
    %v973 = vpop.f32.mrb[0].mxu0
    %v974 = vpop.f32.mrb[0].mxu0
    %v975 = vadd.f32 %v775, %v974
    %v976 = vpop.f32.mrb[0].mxu0
    %977 = vmatprep.mubr.bf16.mxu0 0
    %978 = vmatmul.mubr.bf16.gmra.mrb[0].mxu0 %v737
    %v979 = vpop.f32.mrb[0].mxu0
    %v980 = vadd.f32 %v775, %v979
    %v981 = vpop.f32.mrb[0].mxu0
    %v982 = vpop.f32.mrb[0].mxu0
    %v983 = vadd.f32 %v775, %v982
    %v984 = vpop.f32.mrb[0].mxu0
    %985 = vmatprep.mubr.bf16.mxu0 0
    %986 = vmatmul.mubr.bf16.gmra.mrb[0].mxu0 %v738
    %v987 = vpop.f32.mrb[0].mxu0
    %v988 = vadd.f32 %v775, %v987
    %v989 = vpop.f32.mrb[0].mxu0
    %v990 = vpop.f32.mrb[0].mxu0
    %v991 = vadd.f32 %v775, %v990
    %v992 = vpop.f32.mrb[0].mxu0
    %993 = vmatprep.mubr.bf16.mxu0 0
    %994 = vmatmul.mubr.bf16.gmra.mrb[0].mxu0 %v739
    %v995 = vpop.f32.mrb[0].mxu0
    %v996 = vadd.f32 %v775, %v995
    %v997 = vpop.f32.mrb[0].mxu0
    %v998 = vpop.f32.mrb[0].mxu0
    %v999 = vadd.f32 %v775, %v998
    %v1000 = vpop.f32.mrb[0].mxu0
    %1001 = vmatprep.mubr.bf16.mxu0 0
    %1002 = vmatmul.mubr.bf16.gmra.mrb[0].mxu0 %v740
    %v1003 = vpop.f32.mrb[0].mxu0
    %v1004 = vadd.f32 %v775, %v1003
    %v1005 = vpop.f32.mrb[0].mxu0
    %v1006 = vpop.f32.mrb[0].mxu0
    %v1007 = vadd.f32 %v775, %v1006
    %v1008 = vpop.f32.mrb[0].mxu0
    %1009 = vmatprep.mubr.bf16.mxu0 0
    %1010 = vmatmul.mubr.bf16.gmra.mrb[0].mxu0 %v741
    %v1011 = vpop.f32.mrb[0].mxu0
    %v1012 = vadd.f32 %v775, %v1011
    %v1013 = vpop.f32.mrb[0].mxu0
    %v1014 = vpop.f32.mrb[0].mxu0
    %v1015 = vadd.f32 %v775, %v1014
    %v1016 = vpop.f32.mrb[0].mxu0
    %1017 = vmatprep.mubr.bf16.mxu0 0
    %1018 = vmatmul.mubr.bf16.gmra.mrb[0].mxu0 %v742
    %v1019 = vpop.f32.mrb[0].mxu0
    %v1020 = vadd.f32 %v775, %v1019
    %v1021 = vpop.f32.mrb[0].mxu0
    %v1022 = vpop.f32.mrb[0].mxu0
    %v1023 = vadd.f32 %v775, %v1022
    %v1024 = vpop.f32.mrb[0].mxu0
    %1025 = vmatprep.mubr.bf16.mxu0 0
    %1026 = vmatmul.mubr.bf16.gmra.mrb[0].mxu0 %v743
    %v1027 = vpop.f32.mrb[0].mxu0
    %v1028 = vadd.f32 %v775, %v1027
    %v1029 = vpop.f32.mrb[0].mxu0
    %v1030 = vpop.f32.mrb[0].mxu0
    %v1031 = vadd.f32 %v775, %v1030
    %v1032 = vpop.f32.mrb[0].mxu0
    %1033 = vmatprep.mubr.bf16.mxu0 0
    %1034 = vmatmul.mubr.bf16.gmra.mrb[0].mxu0 %v744
    %v1035 = vpop.f32.mrb[0].mxu0
    %v1036 = vadd.f32 %v775, %v1035
    %v1037 = vpop.f32.mrb[0].mxu0
    %v1038 = vpop.f32.mrb[0].mxu0
    %v1039 = vadd.f32 %v775, %v1038
    %v1040 = vpop.f32.mrb[0].mxu0
    %1041 = vmatprep.mubr.bf16.mxu0 0
    %1042 = vmatmul.mubr.bf16.gmra.mrb[0].mxu0 %v745
    %v1043 = vpop.f32.mrb[0].mxu0
    %v1044 = vadd.f32 %v775, %v1043
    %v1045 = vpop.f32.mrb[0].mxu0
    %v1046 = vpop.f32.mrb[0].mxu0
    %v1047 = vadd.f32 %v775, %v1046
    %v1048 = vpop.f32.mrb[0].mxu0
    %1049 = vmatprep.mubr.bf16.mxu0 0
    %1050 = vmatmul.mubr.bf16.gmra.mrb[0].mxu0 %v746
    %v1051 = vpop.f32.mrb[0].mxu0
    %v1052 = vadd.f32 %v775, %v1051
    %v1053 = vpop.f32.mrb[0].mxu0
    %v1054 = vpop.f32.mrb[0].mxu0
    %v1055 = vadd.f32 %v775, %v1054
    %v1056 = vpop.f32.mrb[0].mxu0
    %1057 = vmatprep.mubr.bf16.mxu0 0
    %1058 = vmatmul.mubr.bf16.gmra.mrb[0].mxu0 %v747
    %v1059 = vpop.f32.mrb[0].mxu0
    %v1060 = vadd.f32 %v775, %v1059
    %v1061 = vpop.f32.mrb[0].mxu0
    %v1062 = vpop.f32.mrb[0].mxu0
    %v1063 = vadd.f32 %v775, %v1062
    %v1064 = vpop.f32.mrb[0].mxu0
    %1065 = vmatprep.mubr.bf16.mxu0 0
    %1066 = vmatmul.mubr.bf16.gmra.mrb[0].mxu0 %v748
    %v1067 = vpop.f32.mrb[0].mxu0
    %v1068 = vadd.f32 %v775, %v1067
    %v1069 = vpop.f32.mrb[0].mxu0
    %v1070 = vpop.f32.mrb[0].mxu0
    %v1071 = vadd.f32 %v775, %v1070
    %v1072 = vpop.f32.mrb[0].mxu0
    %1073 = vmatprep.mubr.bf16.mxu0 0
    %1074 = vmatmul.mubr.bf16.gmra.mrb[0].mxu0 %v749
    %v1075 = vpop.f32.mrb[0].mxu0
    %v1076 = vadd.f32 %v775, %v1075
    %v1077 = vpop.f32.mrb[0].mxu0
    %v1078 = vpop.f32.mrb[0].mxu0
    %v1079 = vadd.f32 %v775, %v1078
    %v1080 = vpop.f32.mrb[0].mxu0
    %1081 = vmatprep.mubr.bf16.mxu0 0
    %1082 = vmatmul.mubr.bf16.gmra.mrb[0].mxu0 %v750
    %v1083 = vpop.f32.mrb[0].mxu0
    %v1084 = vadd.f32 %v775, %v1083
    %v1085 = vpop.f32.mrb[0].mxu0
    %v1086 = vpop.f32.mrb[0].mxu0
    %v1087 = vadd.f32 %v775, %v1086
    %v1088 = vpop.f32.mrb[0].mxu0
    %1089 = vmatprep.mubr.bf16.mxu0 0
    %1090 = vmatmul.mubr.bf16.gmra.mrb[0].mxu0 %v751
    %v1091 = vpop.f32.mrb[0].mxu0
    %v1092 = vadd.f32 %v775, %v1091
    %v1093 = vpop.f32.mrb[0].mxu0
    %v1094 = vpop.f32.mrb[0].mxu0
    %v1095 = vadd.f32 %v775, %v1094
    %v1096 = vpop.f32.mrb[0].mxu0
    %1097 = vmatprep.mubr.bf16.mxu0 0
    %1098 = vmatmul.mubr.bf16.gmra.mrb[0].mxu0 %v752
    %v1099 = vpop.f32.mrb[0].mxu0
    %v1100 = vadd.f32 %v775, %v1099
    %v1101 = vpop.f32.mrb[0].mxu0
    %v1102 = vpop.f32.mrb[0].mxu0
    %v1103 = vadd.f32 %v775, %v1102
    %v1104 = vpop.f32.mrb[0].mxu0
    %1105 = vmatprep.mubr.bf16.mxu0 0
    %1106 = vmatmul.mubr.bf16.gmra.mrb[0].mxu0 %v753
    %v1107 = vpop.f32.mrb[0].mxu0
    %v1108 = vadd.f32 %v775, %v1107
    %v1109 = vpop.f32.mrb[0].mxu0
    %v1110 = vpop.f32.mrb[0].mxu0
    %v1111 = vadd.f32 %v775, %v1110
    %v1112 = vpop.f32.mrb[0].mxu0
    %1113 = vdwg.mxu0
    %v1114 = vmax.f32 %v860, 0.0
    %v1115 = vmax.f32 %v863, 0.0
    %v1116 = vmax.f32 %v868, 0.0
    %v1117 = vmax.f32 %v871, 0.0
    %v1118 = vmax.f32 %v876, 0.0
    %v1119 = vmax.f32 %v879, 0.0
    %v1120 = vmax.f32 %v884, 0.0
    %v1121 = vmax.f32 %v887, 0.0
    %v1122 = vmax.f32 %v892, 0.0
    %v1123 = vmax.f32 %v895, 0.0
    %v1124 = vmax.f32 %v900, 0.0
    %v1125 = vmax.f32 %v903, 0.0
    %v1126 = vmax.f32 %v908, 0.0
    %v1127 = vmax.f32 %v911, 0.0
    %v1128 = vmax.f32 %v916, 0.0
    %v1129 = vmax.f32 %v919, 0.0
    %v1130 = vmax.f32 %v924, 0.0
    %v1131 = vmax.f32 %v927, 0.0
    %v1132 = vmax.f32 %v932, 0.0
    %v1133 = vmax.f32 %v935, 0.0
    %v1134 = vmax.f32 %v940, 0.0
    %v1135 = vmax.f32 %v943, 0.0
    %v1136 = vmax.f32 %v948, 0.0
    %v1137 = vmax.f32 %v951, 0.0
    %v1138 = vmax.f32 %v956, 0.0
    %v1139 = vmax.f32 %v959, 0.0
    %v1140 = vmax.f32 %v964, 0.0
    %v1141 = vmax.f32 %v967, 0.0
    %v1142 = vmax.f32 %v972, 0.0
    %v1143 = vmax.f32 %v975, 0.0
    %v1144 = vmax.f32 %v980, 0.0
    %v1145 = vmax.f32 %v983, 0.0
    %v1146 = vmax.f32 %v988, 0.0
    %v1147 = vmax.f32 %v991, 0.0
    %v1148 = vmax.f32 %v996, 0.0
    %v1149 = vmax.f32 %v999, 0.0
    %v1150 = vmax.f32 %v1004, 0.0
    %v1151 = vmax.f32 %v1007, 0.0
    %v1152 = vmax.f32 %v1012, 0.0
    %v1153 = vmax.f32 %v1015, 0.0
    %v1154 = vmax.f32 %v1020, 0.0
    %v1155 = vmax.f32 %v1023, 0.0
    %v1156 = vmax.f32 %v1028, 0.0
    %v1157 = vmax.f32 %v1031, 0.0
    %v1158 = vmax.f32 %v1036, 0.0
    %v1159 = vmax.f32 %v1039, 0.0
    %v1160 = vmax.f32 %v1044, 0.0
    %v1161 = vmax.f32 %v1047, 0.0
    %v1162 = vmax.f32 %v1052, 0.0
    %v1163 = vmax.f32 %v1055, 0.0
    %v1164 = vmax.f32 %v1060, 0.0
    %v1165 = vmax.f32 %v1063, 0.0
    %v1166 = vmax.f32 %v1068, 0.0
    %v1167 = vmax.f32 %v1071, 0.0
    %v1168 = vmax.f32 %v1076, 0.0
    %v1169 = vmax.f32 %v1079, 0.0
    %v1170 = vmax.f32 %v1084, 0.0
    %v1171 = vmax.f32 %v1087, 0.0
    %v1172 = vmax.f32 %v1092, 0.0
    %v1173 = vmax.f32 %v1095, 0.0
    %v1174 = vmax.f32 %v1100, 0.0
    %v1175 = vmax.f32 %v1103, 0.0
    %v1176 = vmax.f32 %v1108, 0.0
    %v1177 = vmax.f32 %v1111, 0.0
    %v1178 = vpack.c.bf16 %v1115, %v1114
    %v1179 = vpack.c.bf16 %v1117, %v1116
    %v1180 = vpack.c.bf16 %v1119, %v1118
    %v1181 = vpack.c.bf16 %v1121, %v1120
    %v1182 = vpack.c.bf16 %v1123, %v1122
    %v1183 = vpack.c.bf16 %v1125, %v1124
    %v1184 = vpack.c.bf16 %v1127, %v1126
    %v1185 = vpack.c.bf16 %v1129, %v1128
    %v1186 = vpack.c.bf16 %v1131, %v1130
    %v1187 = vpack.c.bf16 %v1133, %v1132
    %v1188 = vpack.c.bf16 %v1135, %v1134
    %v1189 = vpack.c.bf16 %v1137, %v1136
    %v1190 = vpack.c.bf16 %v1139, %v1138
    %v1191 = vpack.c.bf16 %v1141, %v1140
    %v1192 = vpack.c.bf16 %v1143, %v1142
    %v1193 = vpack.c.bf16 %v1145, %v1144
    %v1194 = vpack.c.bf16 %v1147, %v1146
    %v1195 = vpack.c.bf16 %v1149, %v1148
    %v1196 = vpack.c.bf16 %v1151, %v1150
    %v1197 = vpack.c.bf16 %v1153, %v1152
    %v1198 = vpack.c.bf16 %v1155, %v1154
    %v1199 = vpack.c.bf16 %v1157, %v1156
    %v1200 = vpack.c.bf16 %v1159, %v1158
    %v1201 = vpack.c.bf16 %v1161, %v1160
    %v1202 = vpack.c.bf16 %v1163, %v1162
    %v1203 = vpack.c.bf16 %v1165, %v1164
    %v1204 = vpack.c.bf16 %v1167, %v1166
    %v1205 = vpack.c.bf16 %v1169, %v1168
    %v1206 = vpack.c.bf16 %v1171, %v1170
    %v1207 = vpack.c.bf16 %v1173, %v1172
    %v1208 = vpack.c.bf16 %v1175, %v1174
    %v1209 = vpack.c.bf16 %v1177, %v1176
    %v1210 = vld [vmem:[%s3] sm:$0xf]
    %v1211 = vld [vmem:[%s3 + $0x4] sm:$0xf]
    %v1212 = vld [vmem:[%s3 + $0x8] sm:$0xf]
    %v1213 = vld [vmem:[%s3 + $0xc] sm:$0xf]
    %v1214 = vld [vmem:[%s3 + $0x10] sm:$0xf]
    %v1215 = vld [vmem:[%s3 + $0x14] sm:$0xf]
    %v1216 = vld [vmem:[%s3 + $0x18] sm:$0xf]
    %v1217 = vld [vmem:[%s3 + $0x1c] sm:$0xf]
    %v1218 = vld [vmem:[%s3 + $0x20] sm:$0xf]
    %v1219 = vld [vmem:[%s3 + $0x24] sm:$0xf]
    %v1220 = vld [vmem:[%s3 + $0x28] sm:$0xf]
    %v1221 = vld [vmem:[%s3 + $0x2c] sm:$0xf]
    %v1222 = vld [vmem:[%s3 + $0x30] sm:$0xf]
    %v1223 = vld [vmem:[%s3 + $0x34] sm:$0xf]
    %v1224 = vld [vmem:[%s3 + $0x38] sm:$0xf]
    %v1225 = vld [vmem:[%s3 + $0x3c] sm:$0xf]
    %v1226 = vld [vmem:[%s5 + $0x2] sm:$0x1]
    %v1228 = vlaneseq
    %v1229 = vshrl.u32 %v1228, 7
    %v1230 = vsub.s32 0, %v1229
    %v1231 = vrot.slane %v1226, %v1230
    %v1249 = vunpack.c.l.b16 %v1210
    %v1250 = vunpack.c.l.b16 %v1211
    %v1251 = vunpack.c.l.b16 %v1212
    %v1252 = vunpack.c.l.b16 %v1213
    %v1253 = vunpack.c.l.b16 %v1214
    %v1254 = vunpack.c.l.b16 %v1215
    %v1255 = vunpack.c.l.b16 %v1216
    %v1256 = vunpack.c.l.b16 %v1217
    %v1257 = vunpack.c.l.b16 %v1218
    %v1258 = vunpack.c.l.b16 %v1219
    %v1259 = vunpack.c.l.b16 %v1220
    %v1260 = vunpack.c.l.b16 %v1221
    %v1261 = vunpack.c.l.b16 %v1222
    %v1262 = vunpack.c.l.b16 %v1223
    %v1263 = vunpack.c.l.b16 %v1224
    %v1264 = vunpack.c.l.b16 %v1225
    %v1265 = vpack.c.b16 %v1250, %v1249
    %v1266 = vpack.c.b16 %v1252, %v1251
    %v1267 = vpack.c.b16 %v1254, %v1253
    %v1268 = vpack.c.b16 %v1256, %v1255
    %v1269 = vpack.c.b16 %v1258, %v1257
    %v1270 = vpack.c.b16 %v1260, %v1259
    %v1271 = vpack.c.b16 %v1262, %v1261
    %v1272 = vpack.c.b16 %v1264, %v1263
    %1281 = vmatprep.subr.bf16.mxu0 0
    %1282 = vmatpush1.bf16.msra.mxu0 %v1265
    %1283 = vmatprep.subr.bf16.mxu0 0
    %1284 = vmatpush1.bf16.msra.mxu0 %v1266
    %1285 = vmatprep.subr.bf16.mxu0 0
    %1286 = vmatpush1.bf16.msra.mxu0 %v1267
    %1287 = vmatprep.subr.bf16.mxu0 0
    %1288 = vmatpush1.bf16.msra.mxu0 %v1268
    %1289 = vmatprep.subr.bf16.mxu0 0
    %1290 = vmatpush1.bf16.msra.mxu0 %v1269
    %1291 = vmatprep.subr.bf16.mxu0 0
    %1292 = vmatpush1.bf16.msra.mxu0 %v1270
    %1293 = vmatprep.subr.bf16.mxu0 0
    %1294 = vmatpush1.bf16.msra.mxu0 %v1271
    %1295 = vmatprep.subr.bf16.mxu0 0
    %1296 = vmatpush1.bf16.msra.mxu0 %v1272
    %1297 = vmatprep.subr.bf16.mxu0 0
    %1298 = vmatpush1.bf16.msra.mxu0 0
    %1299 = vmatprep.subr.bf16.mxu0 0
    %1300 = vmatpush1.bf16.msra.mxu0 0
    %1301 = vmatprep.subr.bf16.mxu0 0
    %1302 = vmatpush1.bf16.msra.mxu0 0
    %1303 = vmatprep.subr.bf16.mxu0 0
    %1304 = vmatpush1.bf16.msra.mxu0 0
    %1305 = vmatprep.subr.bf16.mxu0 0
    %1306 = vmatpush1.bf16.msra.mxu0 0
    %1307 = vmatprep.subr.bf16.mxu0 0
    %1308 = vmatpush1.bf16.msra.mxu0 0
    %1309 = vmatprep.subr.bf16.mxu0 0
    %1310 = vmatpush1.bf16.msra.mxu0 0
    %1311 = vmatprep.subr.bf16.mxu0 0
    %1312 = vmatpush1.bf16.msra.mxu0 0
    %1313 = vmatprep.mubr.bf16.mxu0 0
    %1314 = vmatmul.mubr.bf16.gmra.mrb[0].mxu0 %v1178
    %v1315 = vpop.f32.mrb[0].mxu0
    %v1316 = vadd.f32 %v1231, %v1315
    %v1317 = vpop.f32.mrb[0].mxu0
    %v1318 = vpop.f32.mrb[0].mxu0
    %v1319 = vadd.f32 %v1231, %v1318
    %v1320 = vpop.f32.mrb[0].mxu0
    %1321 = vmatprep.mubr.bf16.mxu0 0
    %1322 = vmatmul.mubr.bf16.gmra.mrb[0].mxu0 %v1179
    %v1323 = vpop.f32.mrb[0].mxu0
    %v1324 = vadd.f32 %v1231, %v1323
    %v1325 = vpop.f32.mrb[0].mxu0
    %v1326 = vpop.f32.mrb[0].mxu0
    %v1327 = vadd.f32 %v1231, %v1326
    %v1328 = vpop.f32.mrb[0].mxu0
    %1329 = vmatprep.mubr.bf16.mxu0 0
    %1330 = vmatmul.mubr.bf16.gmra.mrb[0].mxu0 %v1180
    %v1331 = vpop.f32.mrb[0].mxu0
    %v1332 = vadd.f32 %v1231, %v1331
    %v1333 = vpop.f32.mrb[0].mxu0
    %v1334 = vpop.f32.mrb[0].mxu0
    %v1335 = vadd.f32 %v1231, %v1334
    %v1336 = vpop.f32.mrb[0].mxu0
    %1337 = vmatprep.mubr.bf16.mxu0 0
    %1338 = vmatmul.mubr.bf16.gmra.mrb[0].mxu0 %v1181
    %v1339 = vpop.f32.mrb[0].mxu0
    %v1340 = vadd.f32 %v1231, %v1339
    %v1341 = vpop.f32.mrb[0].mxu0
    %v1342 = vpop.f32.mrb[0].mxu0
    %v1343 = vadd.f32 %v1231, %v1342
    %v1344 = vpop.f32.mrb[0].mxu0
    %1345 = vmatprep.mubr.bf16.mxu0 0
    %1346 = vmatmul.mubr.bf16.gmra.mrb[0].mxu0 %v1182
    %v1347 = vpop.f32.mrb[0].mxu0
    %v1348 = vadd.f32 %v1231, %v1347
    %v1349 = vpop.f32.mrb[0].mxu0
    %v1350 = vpop.f32.mrb[0].mxu0
    %v1351 = vadd.f32 %v1231, %v1350
    %v1352 = vpop.f32.mrb[0].mxu0
    %1353 = vmatprep.mubr.bf16.mxu0 0
    %1354 = vmatmul.mubr.bf16.gmra.mrb[0].mxu0 %v1183
    %v1355 = vpop.f32.mrb[0].mxu0
    %v1356 = vadd.f32 %v1231, %v1355
    %v1357 = vpop.f32.mrb[0].mxu0
    %v1358 = vpop.f32.mrb[0].mxu0
    %v1359 = vadd.f32 %v1231, %v1358
    %v1360 = vpop.f32.mrb[0].mxu0
    %1361 = vmatprep.mubr.bf16.mxu0 0
    %1362 = vmatmul.mubr.bf16.gmra.mrb[0].mxu0 %v1184
    %v1363 = vpop.f32.mrb[0].mxu0
    %v1364 = vadd.f32 %v1231, %v1363
    %v1365 = vpop.f32.mrb[0].mxu0
    %v1366 = vpop.f32.mrb[0].mxu0
    %v1367 = vadd.f32 %v1231, %v1366
    %v1368 = vpop.f32.mrb[0].mxu0
    %1369 = vmatprep.mubr.bf16.mxu0 0
    %1370 = vmatmul.mubr.bf16.gmra.mrb[0].mxu0 %v1185
    %v1371 = vpop.f32.mrb[0].mxu0
    %v1372 = vadd.f32 %v1231, %v1371
    %v1373 = vpop.f32.mrb[0].mxu0
    %v1374 = vpop.f32.mrb[0].mxu0
    %v1375 = vadd.f32 %v1231, %v1374
    %v1376 = vpop.f32.mrb[0].mxu0
    %1377 = vmatprep.mubr.bf16.mxu0 0
    %1378 = vmatmul.mubr.bf16.gmra.mrb[0].mxu0 %v1186
    %v1379 = vpop.f32.mrb[0].mxu0
    %v1380 = vadd.f32 %v1231, %v1379
    %v1381 = vpop.f32.mrb[0].mxu0
    %v1382 = vpop.f32.mrb[0].mxu0
    %v1383 = vadd.f32 %v1231, %v1382
    %v1384 = vpop.f32.mrb[0].mxu0
    %1385 = vmatprep.mubr.bf16.mxu0 0
    %1386 = vmatmul.mubr.bf16.gmra.mrb[0].mxu0 %v1187
    %v1387 = vpop.f32.mrb[0].mxu0
    %v1388 = vadd.f32 %v1231, %v1387
    %v1389 = vpop.f32.mrb[0].mxu0
    %v1390 = vpop.f32.mrb[0].mxu0
    %v1391 = vadd.f32 %v1231, %v1390
    %v1392 = vpop.f32.mrb[0].mxu0
    %1393 = vmatprep.mubr.bf16.mxu0 0
    %1394 = vmatmul.mubr.bf16.gmra.mrb[0].mxu0 %v1188
    %v1395 = vpop.f32.mrb[0].mxu0
    %v1396 = vadd.f32 %v1231, %v1395
    %v1397 = vpop.f32.mrb[0].mxu0
    %v1398 = vpop.f32.mrb[0].mxu0
    %v1399 = vadd.f32 %v1231, %v1398
    %v1400 = vpop.f32.mrb[0].mxu0
    %1401 = vmatprep.mubr.bf16.mxu0 0
    %1402 = vmatmul.mubr.bf16.gmra.mrb[0].mxu0 %v1189
    %v1403 = vpop.f32.mrb[0].mxu0
    %v1404 = vadd.f32 %v1231, %v1403
    %v1405 = vpop.f32.mrb[0].mxu0
    %v1406 = vpop.f32.mrb[0].mxu0
    %v1407 = vadd.f32 %v1231, %v1406
    %v1408 = vpop.f32.mrb[0].mxu0
    %1409 = vmatprep.mubr.bf16.mxu0 0
    %1410 = vmatmul.mubr.bf16.gmra.mrb[0].mxu0 %v1190
    %v1411 = vpop.f32.mrb[0].mxu0
    %v1412 = vadd.f32 %v1231, %v1411
    %v1413 = vpop.f32.mrb[0].mxu0
    %v1414 = vpop.f32.mrb[0].mxu0
    %v1415 = vadd.f32 %v1231, %v1414
    %v1416 = vpop.f32.mrb[0].mxu0
    %1417 = vmatprep.mubr.bf16.mxu0 0
    %1418 = vmatmul.mubr.bf16.gmra.mrb[0].mxu0 %v1191
    %v1419 = vpop.f32.mrb[0].mxu0
    %v1420 = vadd.f32 %v1231, %v1419
    %v1421 = vpop.f32.mrb[0].mxu0
    %v1422 = vpop.f32.mrb[0].mxu0
    %v1423 = vadd.f32 %v1231, %v1422
    %v1424 = vpop.f32.mrb[0].mxu0
    %1425 = vmatprep.mubr.bf16.mxu0 0
    %1426 = vmatmul.mubr.bf16.gmra.mrb[0].mxu0 %v1192
    %v1427 = vpop.f32.mrb[0].mxu0
    %v1428 = vadd.f32 %v1231, %v1427
    %v1429 = vpop.f32.mrb[0].mxu0
    %v1430 = vpop.f32.mrb[0].mxu0
    %v1431 = vadd.f32 %v1231, %v1430
    %v1432 = vpop.f32.mrb[0].mxu0
    %1433 = vmatprep.mubr.bf16.mxu0 0
    %1434 = vmatmul.mubr.bf16.gmra.mrb[0].mxu0 %v1193
    %v1435 = vpop.f32.mrb[0].mxu0
    %v1436 = vadd.f32 %v1231, %v1435
    %v1437 = vpop.f32.mrb[0].mxu0
    %v1438 = vpop.f32.mrb[0].mxu0
    %v1439 = vadd.f32 %v1231, %v1438
    %v1440 = vpop.f32.mrb[0].mxu0
    %1441 = vmatprep.mubr.bf16.mxu0 0
    %1442 = vmatmul.mubr.bf16.gmra.mrb[0].mxu0 %v1194
    %v1443 = vpop.f32.mrb[0].mxu0
    %v1444 = vadd.f32 %v1231, %v1443
    %v1445 = vpop.f32.mrb[0].mxu0
    %v1446 = vpop.f32.mrb[0].mxu0
    %v1447 = vadd.f32 %v1231, %v1446
    %v1448 = vpop.f32.mrb[0].mxu0
    %1449 = vmatprep.mubr.bf16.mxu0 0
    %1450 = vmatmul.mubr.bf16.gmra.mrb[0].mxu0 %v1195
    %v1451 = vpop.f32.mrb[0].mxu0
    %v1452 = vadd.f32 %v1231, %v1451
    %v1453 = vpop.f32.mrb[0].mxu0
    %v1454 = vpop.f32.mrb[0].mxu0
    %v1455 = vadd.f32 %v1231, %v1454
    %v1456 = vpop.f32.mrb[0].mxu0
    %1457 = vmatprep.mubr.bf16.mxu0 0
    %1458 = vmatmul.mubr.bf16.gmra.mrb[0].mxu0 %v1196
    %v1459 = vpop.f32.mrb[0].mxu0
    %v1460 = vadd.f32 %v1231, %v1459
    %v1461 = vpop.f32.mrb[0].mxu0
    %v1462 = vpop.f32.mrb[0].mxu0
    %v1463 = vadd.f32 %v1231, %v1462
    %v1464 = vpop.f32.mrb[0].mxu0
    %1465 = vmatprep.mubr.bf16.mxu0 0
    %1466 = vmatmul.mubr.bf16.gmra.mrb[0].mxu0 %v1197
    %v1467 = vpop.f32.mrb[0].mxu0
    %v1468 = vadd.f32 %v1231, %v1467
    %v1469 = vpop.f32.mrb[0].mxu0
    %v1470 = vpop.f32.mrb[0].mxu0
    %v1471 = vadd.f32 %v1231, %v1470
    %v1472 = vpop.f32.mrb[0].mxu0
    %1473 = vmatprep.mubr.bf16.mxu0 0
    %1474 = vmatmul.mubr.bf16.gmra.mrb[0].mxu0 %v1198
    %v1475 = vpop.f32.mrb[0].mxu0
    %v1476 = vadd.f32 %v1231, %v1475
    %v1477 = vpop.f32.mrb[0].mxu0
    %v1478 = vpop.f32.mrb[0].mxu0
    %v1479 = vadd.f32 %v1231, %v1478
    %v1480 = vpop.f32.mrb[0].mxu0
    %1481 = vmatprep.mubr.bf16.mxu0 0
    %1482 = vmatmul.mubr.bf16.gmra.mrb[0].mxu0 %v1199
    %v1483 = vpop.f32.mrb[0].mxu0
    %v1484 = vadd.f32 %v1231, %v1483
    %v1485 = vpop.f32.mrb[0].mxu0
    %v1486 = vpop.f32.mrb[0].mxu0
    %v1487 = vadd.f32 %v1231, %v1486
    %v1488 = vpop.f32.mrb[0].mxu0
    %1489 = vmatprep.mubr.bf16.mxu0 0
    %1490 = vmatmul.mubr.bf16.gmra.mrb[0].mxu0 %v1200
    %v1491 = vpop.f32.mrb[0].mxu0
    %v1492 = vadd.f32 %v1231, %v1491
    %v1493 = vpop.f32.mrb[0].mxu0
    %v1494 = vpop.f32.mrb[0].mxu0
    %v1495 = vadd.f32 %v1231, %v1494
    %v1496 = vpop.f32.mrb[0].mxu0
    %1497 = vmatprep.mubr.bf16.mxu0 0
    %1498 = vmatmul.mubr.bf16.gmra.mrb[0].mxu0 %v1201
    %v1499 = vpop.f32.mrb[0].mxu0
    %v1500 = vadd.f32 %v1231, %v1499
    %v1501 = vpop.f32.mrb[0].mxu0
    %v1502 = vpop.f32.mrb[0].mxu0
    %v1503 = vadd.f32 %v1231, %v1502
    %v1504 = vpop.f32.mrb[0].mxu0
    %1505 = vmatprep.mubr.bf16.mxu0 0
    %1506 = vmatmul.mubr.bf16.gmra.mrb[0].mxu0 %v1202
    %v1507 = vpop.f32.mrb[0].mxu0
    %v1508 = vadd.f32 %v1231, %v1507
    %v1509 = vpop.f32.mrb[0].mxu0
    %v1510 = vpop.f32.mrb[0].mxu0
    %v1511 = vadd.f32 %v1231, %v1510
    %v1512 = vpop.f32.mrb[0].mxu0
    %1513 = vmatprep.mubr.bf16.mxu0 0
    %1514 = vmatmul.mubr.bf16.gmra.mrb[0].mxu0 %v1203
    %v1515 = vpop.f32.mrb[0].mxu0
    %v1516 = vadd.f32 %v1231, %v1515
    %v1517 = vpop.f32.mrb[0].mxu0
    %v1518 = vpop.f32.mrb[0].mxu0
    %v1519 = vadd.f32 %v1231, %v1518
    %v1520 = vpop.f32.mrb[0].mxu0
    %1521 = vmatprep.mubr.bf16.mxu0 0
    %1522 = vmatmul.mubr.bf16.gmra.mrb[0].mxu0 %v1204
    %v1523 = vpop.f32.mrb[0].mxu0
    %v1524 = vadd.f32 %v1231, %v1523
    %v1525 = vpop.f32.mrb[0].mxu0
    %v1526 = vpop.f32.mrb[0].mxu0
    %v1527 = vadd.f32 %v1231, %v1526
    %v1528 = vpop.f32.mrb[0].mxu0
    %1529 = vmatprep.mubr.bf16.mxu0 0
    %1530 = vmatmul.mubr.bf16.gmra.mrb[0].mxu0 %v1205
    %v1531 = vpop.f32.mrb[0].mxu0
    %v1532 = vadd.f32 %v1231, %v1531
    %v1533 = vpop.f32.mrb[0].mxu0
    %v1534 = vpop.f32.mrb[0].mxu0
    %v1535 = vadd.f32 %v1231, %v1534
    %v1536 = vpop.f32.mrb[0].mxu0
    %1537 = vmatprep.mubr.bf16.mxu0 0
    %1538 = vmatmul.mubr.bf16.gmra.mrb[0].mxu0 %v1206
    %v1539 = vpop.f32.mrb[0].mxu0
    %v1540 = vadd.f32 %v1231, %v1539
    %v1541 = vpop.f32.mrb[0].mxu0
    %v1542 = vpop.f32.mrb[0].mxu0
    %v1543 = vadd.f32 %v1231, %v1542
    %v1544 = vpop.f32.mrb[0].mxu0
    %1545 = vmatprep.mubr.bf16.mxu0 0
    %1546 = vmatmul.mubr.bf16.gmra.mrb[0].mxu0 %v1207
    %v1547 = vpop.f32.mrb[0].mxu0
    %v1548 = vadd.f32 %v1231, %v1547
    %v1549 = vpop.f32.mrb[0].mxu0
    %v1550 = vpop.f32.mrb[0].mxu0
    %v1551 = vadd.f32 %v1231, %v1550
    %v1552 = vpop.f32.mrb[0].mxu0
    %1553 = vmatprep.mubr.bf16.mxu0 0
    %1554 = vmatmul.mubr.bf16.gmra.mrb[0].mxu0 %v1208
    %v1555 = vpop.f32.mrb[0].mxu0
    %v1556 = vadd.f32 %v1231, %v1555
    %v1557 = vpop.f32.mrb[0].mxu0
    %v1558 = vpop.f32.mrb[0].mxu0
    %v1559 = vadd.f32 %v1231, %v1558
    %v1560 = vpop.f32.mrb[0].mxu0
    %1561 = vmatprep.mubr.bf16.mxu0 0
    %1562 = vmatmul.mubr.bf16.gmra.mrb[0].mxu0 %v1209
    %v1563 = vpop.f32.mrb[0].mxu0
    %v1564 = vadd.f32 %v1231, %v1563
    %v1565 = vpop.f32.mrb[0].mxu0
    %v1566 = vpop.f32.mrb[0].mxu0
    %v1567 = vadd.f32 %v1231, %v1566
    %v1568 = vpop.f32.mrb[0].mxu0
    %1569 = vdwg.mxu0
    %v1570 = vmax.f32 %v1316, 0.0
    %v1571 = vmax.f32 %v1319, 0.0
    %v1572 = vmax.f32 %v1324, 0.0
    %v1573 = vmax.f32 %v1327, 0.0
    %v1574 = vmax.f32 %v1332, 0.0
    %v1575 = vmax.f32 %v1335, 0.0
    %v1576 = vmax.f32 %v1340, 0.0
    %v1577 = vmax.f32 %v1343, 0.0
    %v1578 = vmax.f32 %v1348, 0.0
    %v1579 = vmax.f32 %v1351, 0.0
    %v1580 = vmax.f32 %v1356, 0.0
    %v1581 = vmax.f32 %v1359, 0.0
    %v1582 = vmax.f32 %v1364, 0.0
    %v1583 = vmax.f32 %v1367, 0.0
    %v1584 = vmax.f32 %v1372, 0.0
    %v1585 = vmax.f32 %v1375, 0.0
    %v1586 = vmax.f32 %v1380, 0.0
    %v1587 = vmax.f32 %v1383, 0.0
    %v1588 = vmax.f32 %v1388, 0.0
    %v1589 = vmax.f32 %v1391, 0.0
    %v1590 = vmax.f32 %v1396, 0.0
    %v1591 = vmax.f32 %v1399, 0.0
    %v1592 = vmax.f32 %v1404, 0.0
    %v1593 = vmax.f32 %v1407, 0.0
    %v1594 = vmax.f32 %v1412, 0.0
    %v1595 = vmax.f32 %v1415, 0.0
    %v1596 = vmax.f32 %v1420, 0.0
    %v1597 = vmax.f32 %v1423, 0.0
    %v1598 = vmax.f32 %v1428, 0.0
    %v1599 = vmax.f32 %v1431, 0.0
    %v1600 = vmax.f32 %v1436, 0.0
    %v1601 = vmax.f32 %v1439, 0.0
    %v1602 = vmax.f32 %v1444, 0.0
    %v1603 = vmax.f32 %v1447, 0.0
    %v1604 = vmax.f32 %v1452, 0.0
    %v1605 = vmax.f32 %v1455, 0.0
    %v1606 = vmax.f32 %v1460, 0.0
    %v1607 = vmax.f32 %v1463, 0.0
    %v1608 = vmax.f32 %v1468, 0.0
    %v1609 = vmax.f32 %v1471, 0.0
    %v1610 = vmax.f32 %v1476, 0.0
    %v1611 = vmax.f32 %v1479, 0.0
    %v1612 = vmax.f32 %v1484, 0.0
    %v1613 = vmax.f32 %v1487, 0.0
    %v1614 = vmax.f32 %v1492, 0.0
    %v1615 = vmax.f32 %v1495, 0.0
    %v1616 = vmax.f32 %v1500, 0.0
    %v1617 = vmax.f32 %v1503, 0.0
    %v1618 = vmax.f32 %v1508, 0.0
    %v1619 = vmax.f32 %v1511, 0.0
    %v1620 = vmax.f32 %v1516, 0.0
    %v1621 = vmax.f32 %v1519, 0.0
    %v1622 = vmax.f32 %v1524, 0.0
    %v1623 = vmax.f32 %v1527, 0.0
    %v1624 = vmax.f32 %v1532, 0.0
    %v1625 = vmax.f32 %v1535, 0.0
    %v1626 = vmax.f32 %v1540, 0.0
    %v1627 = vmax.f32 %v1543, 0.0
    %v1628 = vmax.f32 %v1548, 0.0
    %v1629 = vmax.f32 %v1551, 0.0
    %v1630 = vmax.f32 %v1556, 0.0
    %v1631 = vmax.f32 %v1559, 0.0
    %v1632 = vmax.f32 %v1564, 0.0
    %v1633 = vmax.f32 %v1567, 0.0
    %v1634 = vpack.c.bf16 %v1571, %v1570
    %v1635 = vpack.c.bf16 %v1573, %v1572
    %v1636 = vpack.c.bf16 %v1575, %v1574
    %v1637 = vpack.c.bf16 %v1577, %v1576
    %v1638 = vpack.c.bf16 %v1579, %v1578
    %v1639 = vpack.c.bf16 %v1581, %v1580
    %v1640 = vpack.c.bf16 %v1583, %v1582
    %v1641 = vpack.c.bf16 %v1585, %v1584
    %v1642 = vpack.c.bf16 %v1587, %v1586
    %v1643 = vpack.c.bf16 %v1589, %v1588
    %v1644 = vpack.c.bf16 %v1591, %v1590
    %v1645 = vpack.c.bf16 %v1593, %v1592
    %v1646 = vpack.c.bf16 %v1595, %v1594
    %v1647 = vpack.c.bf16 %v1597, %v1596
    %v1648 = vpack.c.bf16 %v1599, %v1598
    %v1649 = vpack.c.bf16 %v1601, %v1600
    %v1650 = vpack.c.bf16 %v1603, %v1602
    %v1651 = vpack.c.bf16 %v1605, %v1604
    %v1652 = vpack.c.bf16 %v1607, %v1606
    %v1653 = vpack.c.bf16 %v1609, %v1608
    %v1654 = vpack.c.bf16 %v1611, %v1610
    %v1655 = vpack.c.bf16 %v1613, %v1612
    %v1656 = vpack.c.bf16 %v1615, %v1614
    %v1657 = vpack.c.bf16 %v1617, %v1616
    %v1658 = vpack.c.bf16 %v1619, %v1618
    %v1659 = vpack.c.bf16 %v1621, %v1620
    %v1660 = vpack.c.bf16 %v1623, %v1622
    %v1661 = vpack.c.bf16 %v1625, %v1624
    %v1662 = vpack.c.bf16 %v1627, %v1626
    %v1663 = vpack.c.bf16 %v1629, %v1628
    %v1664 = vpack.c.bf16 %v1631, %v1630
    %v1665 = vpack.c.bf16 %v1633, %v1632
    %v1666 = vld [vmem:[%s4] sm:$0xff]
    %v1667 = vld [vmem:[%s4 + $0x8] sm:$0xff]
    %v1668 = vld [vmem:[%s4 + $0x10] sm:$0xff]
    %v1669 = vld [vmem:[%s4 + $0x18] sm:$0xff]
    %v1670 = vld [vmem:[%s4 + $0x20] sm:$0xff]
    %v1671 = vld [vmem:[%s4 + $0x28] sm:$0xff]
    %v1672 = vld [vmem:[%s4 + $0x30] sm:$0xff]
    %v1673 = vld [vmem:[%s4 + $0x38] sm:$0xff]
    %v1674 = vld [vmem:[%s4 + $0x40] sm:$0xff]
    %v1675 = vld [vmem:[%s4 + $0x48] sm:$0xff]
    %v1676 = vld [vmem:[%s4 + $0x50] sm:$0xff]
    %v1677 = vld [vmem:[%s4 + $0x58] sm:$0xff]
    %v1678 = vld [vmem:[%s4 + $0x60] sm:$0xff]
    %v1679 = vld [vmem:[%s4 + $0x68] sm:$0xff]
    %v1680 = vld [vmem:[%s4 + $0x70] sm:$0xff]
    %v1681 = vld [vmem:[%s4 + $0x78] sm:$0xff]
    %v1682 = vld [vmem:[%s5 + $0x3] sm:$0x3]
    %v1684 = vlaneseq
    %v1685 = vshrl.u32 %v1684, 7
    %v1686 = vsub.s32 0, %v1685
    %v1687 = vrot.slane %v1682, %v1686
    %v1688 = vlaneseq
    %v1689 = vshrl.u32 %v1688, 7
    %v1690 = vsub.s32 1, %v1689
    %v1691 = vrot.slane %v1682, %v1690
    %v1710 = vunpack.c.l.b16 %v1666
    %v1711 = vunpack.c.h.b16 %v1666
    %v1712 = vunpack.c.l.b16 %v1667
    %v1713 = vunpack.c.h.b16 %v1667
    %v1714 = vunpack.c.l.b16 %v1668
    %v1715 = vunpack.c.h.b16 %v1668
    %v1716 = vunpack.c.l.b16 %v1669
    %v1717 = vunpack.c.h.b16 %v1669
    %v1718 = vunpack.c.l.b16 %v1670
    %v1719 = vunpack.c.h.b16 %v1670
    %v1720 = vunpack.c.l.b16 %v1671
    %v1721 = vunpack.c.h.b16 %v1671
    %v1722 = vunpack.c.l.b16 %v1672
    %v1723 = vunpack.c.h.b16 %v1672
    %v1724 = vunpack.c.l.b16 %v1673
    %v1725 = vunpack.c.h.b16 %v1673
    %v1726 = vunpack.c.l.b16 %v1674
    %v1727 = vunpack.c.h.b16 %v1674
    %v1728 = vunpack.c.l.b16 %v1675
    %v1729 = vunpack.c.h.b16 %v1675
    %v1730 = vunpack.c.l.b16 %v1676
    %v1731 = vunpack.c.h.b16 %v1676
    %v1732 = vunpack.c.l.b16 %v1677
    %v1733 = vunpack.c.h.b16 %v1677
    %v1734 = vunpack.c.l.b16 %v1678
    %v1735 = vunpack.c.h.b16 %v1678
    %v1736 = vunpack.c.l.b16 %v1679
    %v1737 = vunpack.c.h.b16 %v1679
    %v1738 = vunpack.c.l.b16 %v1680
    %v1739 = vunpack.c.h.b16 %v1680
    %v1740 = vunpack.c.l.b16 %v1681
    %v1741 = vunpack.c.h.b16 %v1681
    %v1742 = vpack.c.b16 %v1712, %v1710
    %v1743 = vpack.c.b16 %v1713, %v1711
    %v1744 = vpack.c.b16 %v1716, %v1714
    %v1745 = vpack.c.b16 %v1717, %v1715
    %v1746 = vpack.c.b16 %v1720, %v1718
    %v1747 = vpack.c.b16 %v1721, %v1719
    %v1748 = vpack.c.b16 %v1724, %v1722
    %v1749 = vpack.c.b16 %v1725, %v1723
    %v1750 = vpack.c.b16 %v1728, %v1726
    %v1751 = vpack.c.b16 %v1729, %v1727
    %v1752 = vpack.c.b16 %v1732, %v1730
    %v1753 = vpack.c.b16 %v1733, %v1731
    %v1754 = vpack.c.b16 %v1736, %v1734
    %v1755 = vpack.c.b16 %v1737, %v1735
    %v1756 = vpack.c.b16 %v1740, %v1738
    %v1757 = vpack.c.b16 %v1741, %v1739
    %1774 = vmatprep.subr.bf16.mxu0 %v1743
    %1775 = vmatpush1.bf16.msra.mxu0 %v1742
    %1776 = vmatprep.subr.bf16.mxu0 %v1745
    %1777 = vmatpush1.bf16.msra.mxu0 %v1744
    %1778 = vmatprep.subr.bf16.mxu0 %v1747
    %1779 = vmatpush1.bf16.msra.mxu0 %v1746
    %1780 = vmatprep.subr.bf16.mxu0 %v1749
    %1781 = vmatpush1.bf16.msra.mxu0 %v1748
    %1782 = vmatprep.subr.bf16.mxu0 %v1751
    %1783 = vmatpush1.bf16.msra.mxu0 %v1750
    %1784 = vmatprep.subr.bf16.mxu0 %v1753
    %1785 = vmatpush1.bf16.msra.mxu0 %v1752
    %1786 = vmatprep.subr.bf16.mxu0 %v1755
    %1787 = vmatpush1.bf16.msra.mxu0 %v1754
    %1788 = vmatprep.subr.bf16.mxu0 %v1757
    %1789 = vmatpush1.bf16.msra.mxu0 %v1756
    %1790 = vmatprep.subr.bf16.mxu0 0
    %1791 = vmatpush1.bf16.msra.mxu0 0
    %1792 = vmatprep.subr.bf16.mxu0 0
    %1793 = vmatpush1.bf16.msra.mxu0 0
    %1794 = vmatprep.subr.bf16.mxu0 0
    %1795 = vmatpush1.bf16.msra.mxu0 0
    %1796 = vmatprep.subr.bf16.mxu0 0
    %1797 = vmatpush1.bf16.msra.mxu0 0
    %1798 = vmatprep.subr.bf16.mxu0 0
    %1799 = vmatpush1.bf16.msra.mxu0 0
    %1800 = vmatprep.subr.bf16.mxu0 0
    %1801 = vmatpush1.bf16.msra.mxu0 0
    %1802 = vmatprep.subr.bf16.mxu0 0
    %1803 = vmatpush1.bf16.msra.mxu0 0
    %1804 = vmatprep.subr.bf16.mxu0 0
    %1805 = vmatpush1.bf16.msra.mxu0 0
    %1806 = vmatprep.mubr.bf16.mxu0 0
    %1807 = vmatmul.mubr.bf16.gmra.mrb[0].mxu0 %v1634
    %v1808 = vpop.f32.mrb[0].mxu0
    %v1809 = vadd.f32 %v1687, %v1808
    %v1810 = vpop.f32.mrb[0].mxu0
    %v1811 = vadd.f32 %v1691, %v1810
    %v1812 = vpop.f32.mrb[0].mxu0
    %v1813 = vadd.f32 %v1687, %v1812
    %v1814 = vpop.f32.mrb[0].mxu0
    %v1815 = vadd.f32 %v1691, %v1814
    %1816 = vmatprep.mubr.bf16.mxu0 0
    %1817 = vmatmul.mubr.bf16.gmra.mrb[0].mxu0 %v1635
    %v1818 = vpop.f32.mrb[0].mxu0
    %v1819 = vadd.f32 %v1687, %v1818
    %v1820 = vpop.f32.mrb[0].mxu0
    %v1821 = vadd.f32 %v1691, %v1820
    %v1822 = vpop.f32.mrb[0].mxu0
    %v1823 = vadd.f32 %v1687, %v1822
    %v1824 = vpop.f32.mrb[0].mxu0
    %v1825 = vadd.f32 %v1691, %v1824
    %1826 = vmatprep.mubr.bf16.mxu0 0
    %1827 = vmatmul.mubr.bf16.gmra.mrb[0].mxu0 %v1636
    %v1828 = vpop.f32.mrb[0].mxu0
    %v1829 = vadd.f32 %v1687, %v1828
    %v1830 = vpop.f32.mrb[0].mxu0
    %v1831 = vadd.f32 %v1691, %v1830
    %v1832 = vpop.f32.mrb[0].mxu0
    %v1833 = vadd.f32 %v1687, %v1832
    %v1834 = vpop.f32.mrb[0].mxu0
    %v1835 = vadd.f32 %v1691, %v1834
    %1836 = vmatprep.mubr.bf16.mxu0 0
    %1837 = vmatmul.mubr.bf16.gmra.mrb[0].mxu0 %v1637
    %v1838 = vpop.f32.mrb[0].mxu0
    %v1839 = vadd.f32 %v1687, %v1838
    %v1840 = vpop.f32.mrb[0].mxu0
    %v1841 = vadd.f32 %v1691, %v1840
    %v1842 = vpop.f32.mrb[0].mxu0
    %v1843 = vadd.f32 %v1687, %v1842
    %v1844 = vpop.f32.mrb[0].mxu0
    %v1845 = vadd.f32 %v1691, %v1844
    %1846 = vmatprep.mubr.bf16.mxu0 0
    %1847 = vmatmul.mubr.bf16.gmra.mrb[0].mxu0 %v1638
    %v1848 = vpop.f32.mrb[0].mxu0
    %v1849 = vadd.f32 %v1687, %v1848
    %v1850 = vpop.f32.mrb[0].mxu0
    %v1851 = vadd.f32 %v1691, %v1850
    %v1852 = vpop.f32.mrb[0].mxu0
    %v1853 = vadd.f32 %v1687, %v1852
    %v1854 = vpop.f32.mrb[0].mxu0
    %v1855 = vadd.f32 %v1691, %v1854
    %1856 = vmatprep.mubr.bf16.mxu0 0
    %1857 = vmatmul.mubr.bf16.gmra.mrb[0].mxu0 %v1639
    %v1858 = vpop.f32.mrb[0].mxu0
    %v1859 = vadd.f32 %v1687, %v1858
    %v1860 = vpop.f32.mrb[0].mxu0
    %v1861 = vadd.f32 %v1691, %v1860
    %v1862 = vpop.f32.mrb[0].mxu0
    %v1863 = vadd.f32 %v1687, %v1862
    %v1864 = vpop.f32.mrb[0].mxu0
    %v1865 = vadd.f32 %v1691, %v1864
    %1866 = vmatprep.mubr.bf16.mxu0 0
    %1867 = vmatmul.mubr.bf16.gmra.mrb[0].mxu0 %v1640
    %v1868 = vpop.f32.mrb[0].mxu0
    %v1869 = vadd.f32 %v1687, %v1868
    %v1870 = vpop.f32.mrb[0].mxu0
    %v1871 = vadd.f32 %v1691, %v1870
    %v1872 = vpop.f32.mrb[0].mxu0
    %v1873 = vadd.f32 %v1687, %v1872
    %v1874 = vpop.f32.mrb[0].mxu0
    %v1875 = vadd.f32 %v1691, %v1874
    %1876 = vmatprep.mubr.bf16.mxu0 0
    %1877 = vmatmul.mubr.bf16.gmra.mrb[0].mxu0 %v1641
    %v1878 = vpop.f32.mrb[0].mxu0
    %v1879 = vadd.f32 %v1687, %v1878
    %v1880 = vpop.f32.mrb[0].mxu0
    %v1881 = vadd.f32 %v1691, %v1880
    %v1882 = vpop.f32.mrb[0].mxu0
    %v1883 = vadd.f32 %v1687, %v1882
    %v1884 = vpop.f32.mrb[0].mxu0
    %v1885 = vadd.f32 %v1691, %v1884
    %1886 = vmatprep.mubr.bf16.mxu0 0
    %1887 = vmatmul.mubr.bf16.gmra.mrb[0].mxu0 %v1642
    %v1888 = vpop.f32.mrb[0].mxu0
    %v1889 = vadd.f32 %v1687, %v1888
    %v1890 = vpop.f32.mrb[0].mxu0
    %v1891 = vadd.f32 %v1691, %v1890
    %v1892 = vpop.f32.mrb[0].mxu0
    %v1893 = vadd.f32 %v1687, %v1892
    %v1894 = vpop.f32.mrb[0].mxu0
    %v1895 = vadd.f32 %v1691, %v1894
    %1896 = vmatprep.mubr.bf16.mxu0 0
    %1897 = vmatmul.mubr.bf16.gmra.mrb[0].mxu0 %v1643
    %v1898 = vpop.f32.mrb[0].mxu0
    %v1899 = vadd.f32 %v1687, %v1898
    %v1900 = vpop.f32.mrb[0].mxu0
    %v1901 = vadd.f32 %v1691, %v1900
    %v1902 = vpop.f32.mrb[0].mxu0
    %v1903 = vadd.f32 %v1687, %v1902
    %v1904 = vpop.f32.mrb[0].mxu0
    %v1905 = vadd.f32 %v1691, %v1904
    %1906 = vmatprep.mubr.bf16.mxu0 0
    %1907 = vmatmul.mubr.bf16.gmra.mrb[0].mxu0 %v1644
    %v1908 = vpop.f32.mrb[0].mxu0
    %v1909 = vadd.f32 %v1687, %v1908
    %v1910 = vpop.f32.mrb[0].mxu0
    %v1911 = vadd.f32 %v1691, %v1910
    %v1912 = vpop.f32.mrb[0].mxu0
    %v1913 = vadd.f32 %v1687, %v1912
    %v1914 = vpop.f32.mrb[0].mxu0
    %v1915 = vadd.f32 %v1691, %v1914
    %1916 = vmatprep.mubr.bf16.mxu0 0
    %1917 = vmatmul.mubr.bf16.gmra.mrb[0].mxu0 %v1645
    %v1918 = vpop.f32.mrb[0].mxu0
    %v1919 = vadd.f32 %v1687, %v1918
    %v1920 = vpop.f32.mrb[0].mxu0
    %v1921 = vadd.f32 %v1691, %v1920
    %v1922 = vpop.f32.mrb[0].mxu0
    %v1923 = vadd.f32 %v1687, %v1922
    %v1924 = vpop.f32.mrb[0].mxu0
    %v1925 = vadd.f32 %v1691, %v1924
    %1926 = vmatprep.mubr.bf16.mxu0 0
    %1927 = vmatmul.mubr.bf16.gmra.mrb[0].mxu0 %v1646
    %v1928 = vpop.f32.mrb[0].mxu0
    %v1929 = vadd.f32 %v1687, %v1928
    %v1930 = vpop.f32.mrb[0].mxu0
    %v1931 = vadd.f32 %v1691, %v1930
    %v1932 = vpop.f32.mrb[0].mxu0
    %v1933 = vadd.f32 %v1687, %v1932
    %v1934 = vpop.f32.mrb[0].mxu0
    %v1935 = vadd.f32 %v1691, %v1934
    %1936 = vmatprep.mubr.bf16.mxu0 0
    %1937 = vmatmul.mubr.bf16.gmra.mrb[0].mxu0 %v1647
    %v1938 = vpop.f32.mrb[0].mxu0
    %v1939 = vadd.f32 %v1687, %v1938
    %v1940 = vpop.f32.mrb[0].mxu0
    %v1941 = vadd.f32 %v1691, %v1940
    %v1942 = vpop.f32.mrb[0].mxu0
    %v1943 = vadd.f32 %v1687, %v1942
    %v1944 = vpop.f32.mrb[0].mxu0
    %v1945 = vadd.f32 %v1691, %v1944
    %1946 = vmatprep.mubr.bf16.mxu0 0
    %1947 = vmatmul.mubr.bf16.gmra.mrb[0].mxu0 %v1648
    %v1948 = vpop.f32.mrb[0].mxu0
    %v1949 = vadd.f32 %v1687, %v1948
    %v1950 = vpop.f32.mrb[0].mxu0
    %v1951 = vadd.f32 %v1691, %v1950
    %v1952 = vpop.f32.mrb[0].mxu0
    %v1953 = vadd.f32 %v1687, %v1952
    %v1954 = vpop.f32.mrb[0].mxu0
    %v1955 = vadd.f32 %v1691, %v1954
    %1956 = vmatprep.mubr.bf16.mxu0 0
    %1957 = vmatmul.mubr.bf16.gmra.mrb[0].mxu0 %v1649
    %v1958 = vpop.f32.mrb[0].mxu0
    %v1959 = vadd.f32 %v1687, %v1958
    %v1960 = vpop.f32.mrb[0].mxu0
    %v1961 = vadd.f32 %v1691, %v1960
    %v1962 = vpop.f32.mrb[0].mxu0
    %v1963 = vadd.f32 %v1687, %v1962
    %v1964 = vpop.f32.mrb[0].mxu0
    %v1965 = vadd.f32 %v1691, %v1964
    %1966 = vmatprep.mubr.bf16.mxu0 0
    %1967 = vmatmul.mubr.bf16.gmra.mrb[0].mxu0 %v1650
    %v1968 = vpop.f32.mrb[0].mxu0
    %v1969 = vadd.f32 %v1687, %v1968
    %v1970 = vpop.f32.mrb[0].mxu0
    %v1971 = vadd.f32 %v1691, %v1970
    %v1972 = vpop.f32.mrb[0].mxu0
    %v1973 = vadd.f32 %v1687, %v1972
    %v1974 = vpop.f32.mrb[0].mxu0
    %v1975 = vadd.f32 %v1691, %v1974
    %1976 = vmatprep.mubr.bf16.mxu0 0
    %1977 = vmatmul.mubr.bf16.gmra.mrb[0].mxu0 %v1651
    %v1978 = vpop.f32.mrb[0].mxu0
    %v1979 = vadd.f32 %v1687, %v1978
    %v1980 = vpop.f32.mrb[0].mxu0
    %v1981 = vadd.f32 %v1691, %v1980
    %v1982 = vpop.f32.mrb[0].mxu0
    %v1983 = vadd.f32 %v1687, %v1982
    %v1984 = vpop.f32.mrb[0].mxu0
    %v1985 = vadd.f32 %v1691, %v1984
    %1986 = vmatprep.mubr.bf16.mxu0 0
    %1987 = vmatmul.mubr.bf16.gmra.mrb[0].mxu0 %v1652
    %v1988 = vpop.f32.mrb[0].mxu0
    %v1989 = vadd.f32 %v1687, %v1988
    %v1990 = vpop.f32.mrb[0].mxu0
    %v1991 = vadd.f32 %v1691, %v1990
    %v1992 = vpop.f32.mrb[0].mxu0
    %v1993 = vadd.f32 %v1687, %v1992
    %v1994 = vpop.f32.mrb[0].mxu0
    %v1995 = vadd.f32 %v1691, %v1994
    %1996 = vmatprep.mubr.bf16.mxu0 0
    %1997 = vmatmul.mubr.bf16.gmra.mrb[0].mxu0 %v1653
    %v1998 = vpop.f32.mrb[0].mxu0
    %v1999 = vadd.f32 %v1687, %v1998
    %v2000 = vpop.f32.mrb[0].mxu0
    %v2001 = vadd.f32 %v1691, %v2000
    %v2002 = vpop.f32.mrb[0].mxu0
    %v2003 = vadd.f32 %v1687, %v2002
    %v2004 = vpop.f32.mrb[0].mxu0
    %v2005 = vadd.f32 %v1691, %v2004
    %2006 = vmatprep.mubr.bf16.mxu0 0
    %2007 = vmatmul.mubr.bf16.gmra.mrb[0].mxu0 %v1654
    %v2008 = vpop.f32.mrb[0].mxu0
    %v2009 = vadd.f32 %v1687, %v2008
    %v2010 = vpop.f32.mrb[0].mxu0
    %v2011 = vadd.f32 %v1691, %v2010
    %v2012 = vpop.f32.mrb[0].mxu0
    %v2013 = vadd.f32 %v1687, %v2012
    %v2014 = vpop.f32.mrb[0].mxu0
    %v2015 = vadd.f32 %v1691, %v2014
    %2016 = vmatprep.mubr.bf16.mxu0 0
    %2017 = vmatmul.mubr.bf16.gmra.mrb[0].mxu0 %v1655
    %v2018 = vpop.f32.mrb[0].mxu0
    %v2019 = vadd.f32 %v1687, %v2018
    %v2020 = vpop.f32.mrb[0].mxu0
    %v2021 = vadd.f32 %v1691, %v2020
    %v2022 = vpop.f32.mrb[0].mxu0
    %v2023 = vadd.f32 %v1687, %v2022
    %v2024 = vpop.f32.mrb[0].mxu0
    %v2025 = vadd.f32 %v1691, %v2024
    %2026 = vmatprep.mubr.bf16.mxu0 0
    %2027 = vmatmul.mubr.bf16.gmra.mrb[0].mxu0 %v1656
    %v2028 = vpop.f32.mrb[0].mxu0
    %v2029 = vadd.f32 %v1687, %v2028
    %v2030 = vpop.f32.mrb[0].mxu0
    %v2031 = vadd.f32 %v1691, %v2030
    %v2032 = vpop.f32.mrb[0].mxu0
    %v2033 = vadd.f32 %v1687, %v2032
    %v2034 = vpop.f32.mrb[0].mxu0
    %v2035 = vadd.f32 %v1691, %v2034
    %2036 = vmatprep.mubr.bf16.mxu0 0
    %2037 = vmatmul.mubr.bf16.gmra.mrb[0].mxu0 %v1657
    %v2038 = vpop.f32.mrb[0].mxu0
    %v2039 = vadd.f32 %v1687, %v2038
    %v2040 = vpop.f32.mrb[0].mxu0
    %v2041 = vadd.f32 %v1691, %v2040
    %v2042 = vpop.f32.mrb[0].mxu0
    %v2043 = vadd.f32 %v1687, %v2042
    %v2044 = vpop.f32.mrb[0].mxu0
    %v2045 = vadd.f32 %v1691, %v2044
    %2046 = vmatprep.mubr.bf16.mxu0 0
    %2047 = vmatmul.mubr.bf16.gmra.mrb[0].mxu0 %v1658
    %v2048 = vpop.f32.mrb[0].mxu0
    %v2049 = vadd.f32 %v1687, %v2048
    %v2050 = vpop.f32.mrb[0].mxu0
    %v2051 = vadd.f32 %v1691, %v2050
    %v2052 = vpop.f32.mrb[0].mxu0
    %v2053 = vadd.f32 %v1687, %v2052
    %v2054 = vpop.f32.mrb[0].mxu0
    %v2055 = vadd.f32 %v1691, %v2054
    %2056 = vmatprep.mubr.bf16.mxu0 0
    %2057 = vmatmul.mubr.bf16.gmra.mrb[0].mxu0 %v1659
    %v2058 = vpop.f32.mrb[0].mxu0
    %v2059 = vadd.f32 %v1687, %v2058
    %v2060 = vpop.f32.mrb[0].mxu0
    %v2061 = vadd.f32 %v1691, %v2060
    %v2062 = vpop.f32.mrb[0].mxu0
    %v2063 = vadd.f32 %v1687, %v2062
    %v2064 = vpop.f32.mrb[0].mxu0
    %v2065 = vadd.f32 %v1691, %v2064
    %2066 = vmatprep.mubr.bf16.mxu0 0
    %2067 = vmatmul.mubr.bf16.gmra.mrb[0].mxu0 %v1660
    %v2068 = vpop.f32.mrb[0].mxu0
    %v2069 = vadd.f32 %v1687, %v2068
    %v2070 = vpop.f32.mrb[0].mxu0
    %v2071 = vadd.f32 %v1691, %v2070
    %v2072 = vpop.f32.mrb[0].mxu0
    %v2073 = vadd.f32 %v1687, %v2072
    %v2074 = vpop.f32.mrb[0].mxu0
    %v2075 = vadd.f32 %v1691, %v2074
    %2076 = vmatprep.mubr.bf16.mxu0 0
    %2077 = vmatmul.mubr.bf16.gmra.mrb[0].mxu0 %v1661
    %v2078 = vpop.f32.mrb[0].mxu0
    %v2079 = vadd.f32 %v1687, %v2078
    %v2080 = vpop.f32.mrb[0].mxu0
    %v2081 = vadd.f32 %v1691, %v2080
    %v2082 = vpop.f32.mrb[0].mxu0
    %v2083 = vadd.f32 %v1687, %v2082
    %v2084 = vpop.f32.mrb[0].mxu0
    %v2085 = vadd.f32 %v1691, %v2084
    %2086 = vmatprep.mubr.bf16.mxu0 0
    %2087 = vmatmul.mubr.bf16.gmra.mrb[0].mxu0 %v1662
    %v2088 = vpop.f32.mrb[0].mxu0
    %v2089 = vadd.f32 %v1687, %v2088
    %v2090 = vpop.f32.mrb[0].mxu0
    %v2091 = vadd.f32 %v1691, %v2090
    %v2092 = vpop.f32.mrb[0].mxu0
    %v2093 = vadd.f32 %v1687, %v2092
    %v2094 = vpop.f32.mrb[0].mxu0
    %v2095 = vadd.f32 %v1691, %v2094
    %2096 = vmatprep.mubr.bf16.mxu0 0
    %2097 = vmatmul.mubr.bf16.gmra.mrb[0].mxu0 %v1663
    %v2098 = vpop.f32.mrb[0].mxu0
    %v2099 = vadd.f32 %v1687, %v2098
    %v2100 = vpop.f32.mrb[0].mxu0
    %v2101 = vadd.f32 %v1691, %v2100
    %v2102 = vpop.f32.mrb[0].mxu0
    %v2103 = vadd.f32 %v1687, %v2102
    %v2104 = vpop.f32.mrb[0].mxu0
    %v2105 = vadd.f32 %v1691, %v2104
    %2106 = vmatprep.mubr.bf16.mxu0 0
    %2107 = vmatmul.mubr.bf16.gmra.mrb[0].mxu0 %v1664
    %v2108 = vpop.f32.mrb[0].mxu0
    %v2109 = vadd.f32 %v1687, %v2108
    %v2110 = vpop.f32.mrb[0].mxu0
    %v2111 = vadd.f32 %v1691, %v2110
    %v2112 = vpop.f32.mrb[0].mxu0
    %v2113 = vadd.f32 %v1687, %v2112
    %v2114 = vpop.f32.mrb[0].mxu0
    %v2115 = vadd.f32 %v1691, %v2114
    %2116 = vmatprep.mubr.bf16.mxu0 0
    %2117 = vmatmul.mubr.bf16.gmra.mrb[0].mxu0 %v1665
    %v2118 = vpop.f32.mrb[0].mxu0
    %v2119 = vadd.f32 %v1687, %v2118
    %v2120 = vpop.f32.mrb[0].mxu0
    %v2121 = vadd.f32 %v1691, %v2120
    %v2122 = vpop.f32.mrb[0].mxu0
    %v2123 = vadd.f32 %v1687, %v2122
    %v2124 = vpop.f32.mrb[0].mxu0
    %v2125 = vadd.f32 %v1691, %v2124
    %2126 = vdwg.mxu0
    %v2127 = vtanh.pop %v1809
    %v2128 = vtanh.pop %v1811
    %v2129 = vtanh.pop %v1813
    %v2130 = vtanh.pop %v1815
    %v2131 = vtanh.pop %v1819
    %v2132 = vtanh.pop %v1821
    %v2133 = vtanh.pop %v1823
    %v2134 = vtanh.pop %v1825
    %v2135 = vtanh.pop %v1829
    %v2136 = vtanh.pop %v1831
    %v2137 = vtanh.pop %v1833
    %v2138 = vtanh.pop %v1835
    %v2139 = vtanh.pop %v1839
    %v2140 = vtanh.pop %v1841
    %v2141 = vtanh.pop %v1843
    %v2142 = vtanh.pop %v1845
    %v2143 = vtanh.pop %v1849
    %v2144 = vtanh.pop %v1851
    %v2145 = vtanh.pop %v1853
    %v2146 = vtanh.pop %v1855
    %v2147 = vtanh.pop %v1859
    %v2148 = vtanh.pop %v1861
    %v2149 = vtanh.pop %v1863
    %v2150 = vtanh.pop %v1865
    %v2151 = vtanh.pop %v1869
    %v2152 = vtanh.pop %v1871
    %v2153 = vtanh.pop %v1873
    %v2154 = vtanh.pop %v1875
    %v2155 = vtanh.pop %v1879
    %v2156 = vtanh.pop %v1881
    %v2157 = vtanh.pop %v1883
    %v2158 = vtanh.pop %v1885
    %v2159 = vtanh.pop %v1889
    %v2160 = vtanh.pop %v1891
    %v2161 = vtanh.pop %v1893
    %v2162 = vtanh.pop %v1895
    %v2163 = vtanh.pop %v1899
    %v2164 = vtanh.pop %v1901
    %v2165 = vtanh.pop %v1903
    %v2166 = vtanh.pop %v1905
    %v2167 = vtanh.pop %v1909
    %v2168 = vtanh.pop %v1911
    %v2169 = vtanh.pop %v1913
    %v2170 = vtanh.pop %v1915
    %v2171 = vtanh.pop %v1919
    %v2172 = vtanh.pop %v1921
    %v2173 = vtanh.pop %v1923
    %v2174 = vtanh.pop %v1925
    %v2175 = vtanh.pop %v1929
    %v2176 = vtanh.pop %v1931
    %v2177 = vtanh.pop %v1933
    %v2178 = vtanh.pop %v1935
    %v2179 = vtanh.pop %v1939
    %v2180 = vtanh.pop %v1941
    %v2181 = vtanh.pop %v1943
    %v2182 = vtanh.pop %v1945
    %v2183 = vtanh.pop %v1949
    %v2184 = vtanh.pop %v1951
    %v2185 = vtanh.pop %v1953
    %v2186 = vtanh.pop %v1955
    %v2187 = vtanh.pop %v1959
    %v2188 = vtanh.pop %v1961
    %v2189 = vtanh.pop %v1963
    %v2190 = vtanh.pop %v1965
    %v2191 = vtanh.pop %v1969
    %v2192 = vtanh.pop %v1971
    %v2193 = vtanh.pop %v1973
    %v2194 = vtanh.pop %v1975
    %v2195 = vtanh.pop %v1979
    %v2196 = vtanh.pop %v1981
    %v2197 = vtanh.pop %v1983
    %v2198 = vtanh.pop %v1985
    %v2199 = vtanh.pop %v1989
    %v2200 = vtanh.pop %v1991
    %v2201 = vtanh.pop %v1993
    %v2202 = vtanh.pop %v1995
    %v2203 = vtanh.pop %v1999
    %v2204 = vtanh.pop %v2001
    %v2205 = vtanh.pop %v2003
    %v2206 = vtanh.pop %v2005
    %v2207 = vtanh.pop %v2009
    %v2208 = vtanh.pop %v2011
    %v2209 = vtanh.pop %v2013
    %v2210 = vtanh.pop %v2015
    %v2211 = vtanh.pop %v2019
    %v2212 = vtanh.pop %v2021
    %v2213 = vtanh.pop %v2023
    %v2214 = vtanh.pop %v2025
    %v2215 = vtanh.pop %v2029
    %v2216 = vtanh.pop %v2031
    %v2217 = vtanh.pop %v2033
    %v2218 = vtanh.pop %v2035
    %v2219 = vtanh.pop %v2039
    %v2220 = vtanh.pop %v2041
    %v2221 = vtanh.pop %v2043
    %v2222 = vtanh.pop %v2045
    %v2223 = vtanh.pop %v2049
    %v2224 = vtanh.pop %v2051
    %v2225 = vtanh.pop %v2053
    %v2226 = vtanh.pop %v2055
    %v2227 = vtanh.pop %v2059
    %v2228 = vtanh.pop %v2061
    %v2229 = vtanh.pop %v2063
    %v2230 = vtanh.pop %v2065
    %v2231 = vtanh.pop %v2069
    %v2232 = vtanh.pop %v2071
    %v2233 = vtanh.pop %v2073
    %v2234 = vtanh.pop %v2075
    %v2235 = vtanh.pop %v2079
    %v2236 = vtanh.pop %v2081
    %v2237 = vtanh.pop %v2083
    %v2238 = vtanh.pop %v2085
    %v2239 = vtanh.pop %v2089
    %v2240 = vtanh.pop %v2091
    %v2241 = vtanh.pop %v2093
    %v2242 = vtanh.pop %v2095
    %v2243 = vtanh.pop %v2099
    %v2244 = vtanh.pop %v2101
    %v2245 = vtanh.pop %v2103
    %v2246 = vtanh.pop %v2105
    %v2247 = vtanh.pop %v2109
    %v2248 = vtanh.pop %v2111
    %v2249 = vtanh.pop %v2113
    %v2250 = vtanh.pop %v2115
    %v2251 = vtanh.pop %v2119
    %v2252 = vtanh.pop %v2121
    %v2253 = vtanh.pop %v2123
    %v2254 = vtanh.pop %v2125
    %v2255 = vmul.f32 %v2127, 2.0
    %v2256 = vmul.f32 %v2128, 2.0
    %v2257 = vmul.f32 %v2129, 2.0
    %v2258 = vmul.f32 %v2130, 2.0
    %v2259 = vmul.f32 %v2131, 2.0
    %v2260 = vmul.f32 %v2132, 2.0
    %v2261 = vmul.f32 %v2133, 2.0
    %v2262 = vmul.f32 %v2134, 2.0
    %v2263 = vmul.f32 %v2135, 2.0
    %v2264 = vmul.f32 %v2136, 2.0
    %v2265 = vmul.f32 %v2137, 2.0
    %v2266 = vmul.f32 %v2138, 2.0
    %v2267 = vmul.f32 %v2139, 2.0
    %v2268 = vmul.f32 %v2140, 2.0
    %v2269 = vmul.f32 %v2141, 2.0
    %v2270 = vmul.f32 %v2142, 2.0
    %v2271 = vmul.f32 %v2143, 2.0
    %v2272 = vmul.f32 %v2144, 2.0
    %v2273 = vmul.f32 %v2145, 2.0
    %v2274 = vmul.f32 %v2146, 2.0
    %v2275 = vmul.f32 %v2147, 2.0
    %v2276 = vmul.f32 %v2148, 2.0
    %v2277 = vmul.f32 %v2149, 2.0
    %v2278 = vmul.f32 %v2150, 2.0
    %v2279 = vmul.f32 %v2151, 2.0
    %v2280 = vmul.f32 %v2152, 2.0
    %v2281 = vmul.f32 %v2153, 2.0
    %v2282 = vmul.f32 %v2154, 2.0
    %v2283 = vmul.f32 %v2155, 2.0
    %v2284 = vmul.f32 %v2156, 2.0
    %v2285 = vmul.f32 %v2157, 2.0
    %v2286 = vmul.f32 %v2158, 2.0
    %v2287 = vmul.f32 %v2159, 2.0
    %v2288 = vmul.f32 %v2160, 2.0
    %v2289 = vmul.f32 %v2161, 2.0
    %v2290 = vmul.f32 %v2162, 2.0
    %v2291 = vmul.f32 %v2163, 2.0
    %v2292 = vmul.f32 %v2164, 2.0
    %v2293 = vmul.f32 %v2165, 2.0
    %v2294 = vmul.f32 %v2166, 2.0
    %v2295 = vmul.f32 %v2167, 2.0
    %v2296 = vmul.f32 %v2168, 2.0
    %v2297 = vmul.f32 %v2169, 2.0
    %v2298 = vmul.f32 %v2170, 2.0
    %v2299 = vmul.f32 %v2171, 2.0
    %v2300 = vmul.f32 %v2172, 2.0
    %v2301 = vmul.f32 %v2173, 2.0
    %v2302 = vmul.f32 %v2174, 2.0
    %v2303 = vmul.f32 %v2175, 2.0
    %v2304 = vmul.f32 %v2176, 2.0
    %v2305 = vmul.f32 %v2177, 2.0
    %v2306 = vmul.f32 %v2178, 2.0
    %v2307 = vmul.f32 %v2179, 2.0
    %v2308 = vmul.f32 %v2180, 2.0
    %v2309 = vmul.f32 %v2181, 2.0
    %v2310 = vmul.f32 %v2182, 2.0
    %v2311 = vmul.f32 %v2183, 2.0
    %v2312 = vmul.f32 %v2184, 2.0
    %v2313 = vmul.f32 %v2185, 2.0
    %v2314 = vmul.f32 %v2186, 2.0
    %v2315 = vmul.f32 %v2187, 2.0
    %v2316 = vmul.f32 %v2188, 2.0
    %v2317 = vmul.f32 %v2189, 2.0
    %v2318 = vmul.f32 %v2190, 2.0
    %v2319 = vmul.f32 %v2191, 2.0
    %v2320 = vmul.f32 %v2192, 2.0
    %v2321 = vmul.f32 %v2193, 2.0
    %v2322 = vmul.f32 %v2194, 2.0
    %v2323 = vmul.f32 %v2195, 2.0
    %v2324 = vmul.f32 %v2196, 2.0
    %v2325 = vmul.f32 %v2197, 2.0
    %v2326 = vmul.f32 %v2198, 2.0
    %v2327 = vmul.f32 %v2199, 2.0
    %v2328 = vmul.f32 %v2200, 2.0
    %v2329 = vmul.f32 %v2201, 2.0
    %v2330 = vmul.f32 %v2202, 2.0
    %v2331 = vmul.f32 %v2203, 2.0
    %v2332 = vmul.f32 %v2204, 2.0
    %v2333 = vmul.f32 %v2205, 2.0
    %v2334 = vmul.f32 %v2206, 2.0
    %v2335 = vmul.f32 %v2207, 2.0
    %v2336 = vmul.f32 %v2208, 2.0
    %v2337 = vmul.f32 %v2209, 2.0
    %v2338 = vmul.f32 %v2210, 2.0
    %v2339 = vmul.f32 %v2211, 2.0
    %v2340 = vmul.f32 %v2212, 2.0
    %v2341 = vmul.f32 %v2213, 2.0
    %v2342 = vmul.f32 %v2214, 2.0
    %v2343 = vmul.f32 %v2215, 2.0
    %v2344 = vmul.f32 %v2216, 2.0
    %v2345 = vmul.f32 %v2217, 2.0
    %v2346 = vmul.f32 %v2218, 2.0
    %v2347 = vmul.f32 %v2219, 2.0
    %v2348 = vmul.f32 %v2220, 2.0
    %v2349 = vmul.f32 %v2221, 2.0
    %v2350 = vmul.f32 %v2222, 2.0
    %v2351 = vmul.f32 %v2223, 2.0
    %v2352 = vmul.f32 %v2224, 2.0
    %v2353 = vmul.f32 %v2225, 2.0
    %v2354 = vmul.f32 %v2226, 2.0
    %v2355 = vmul.f32 %v2227, 2.0
    %v2356 = vmul.f32 %v2228, 2.0
    %v2357 = vmul.f32 %v2229, 2.0
    %v2358 = vmul.f32 %v2230, 2.0
    %v2359 = vmul.f32 %v2231, 2.0
    %v2360 = vmul.f32 %v2232, 2.0
    %v2361 = vmul.f32 %v2233, 2.0
    %v2362 = vmul.f32 %v2234, 2.0
    %v2363 = vmul.f32 %v2235, 2.0
    %v2364 = vmul.f32 %v2236, 2.0
    %v2365 = vmul.f32 %v2237, 2.0
    %v2366 = vmul.f32 %v2238, 2.0
    %v2367 = vmul.f32 %v2239, 2.0
    %v2368 = vmul.f32 %v2240, 2.0
    %v2369 = vmul.f32 %v2241, 2.0
    %v2370 = vmul.f32 %v2242, 2.0
    %v2371 = vmul.f32 %v2243, 2.0
    %v2372 = vmul.f32 %v2244, 2.0
    %v2373 = vmul.f32 %v2245, 2.0
    %v2374 = vmul.f32 %v2246, 2.0
    %v2375 = vmul.f32 %v2247, 2.0
    %v2376 = vmul.f32 %v2248, 2.0
    %v2377 = vmul.f32 %v2249, 2.0
    %v2378 = vmul.f32 %v2250, 2.0
    %v2379 = vmul.f32 %v2251, 2.0
    %v2380 = vmul.f32 %v2252, 2.0
    %v2381 = vmul.f32 %v2253, 2.0
    %v2382 = vmul.f32 %v2254, 2.0
    %2383 = vst [vmem:[#allocation2] sm:$0xff] %v2255
    %2384 = vst [vmem:[#allocation2 + $0x8] sm:$0xff] %v2256
    %2385 = vst [vmem:[#allocation2 + $0x10] sm:$0xff] %v2257
    %2386 = vst [vmem:[#allocation2 + $0x18] sm:$0xff] %v2258
    %2387 = vst [vmem:[#allocation2 + $0x20] sm:$0xff] %v2259
    %2388 = vst [vmem:[#allocation2 + $0x28] sm:$0xff] %v2260
    %2389 = vst [vmem:[#allocation2 + $0x30] sm:$0xff] %v2261
    %2390 = vst [vmem:[#allocation2 + $0x38] sm:$0xff] %v2262
    %2391 = vst [vmem:[#allocation2 + $0x40] sm:$0xff] %v2263
    %2392 = vst [vmem:[#allocation2 + $0x48] sm:$0xff] %v2264
    %2393 = vst [vmem:[#allocation2 + $0x50] sm:$0xff] %v2265
    %2394 = vst [vmem:[#allocation2 + $0x58] sm:$0xff] %v2266
    %2395 = vst [vmem:[#allocation2 + $0x60] sm:$0xff] %v2267
    %2396 = vst [vmem:[#allocation2 + $0x68] sm:$0xff] %v2268
    %2397 = vst [vmem:[#allocation2 + $0x70] sm:$0xff] %v2269
    %2398 = vst [vmem:[#allocation2 + $0x78] sm:$0xff] %v2270
    %2399 = vst [vmem:[#allocation2 + $0x80] sm:$0xff] %v2271
    %2400 = vst [vmem:[#allocation2 + $0x88] sm:$0xff] %v2272
    %2401 = vst [vmem:[#allocation2 + $0x90] sm:$0xff] %v2273
    %2402 = vst [vmem:[#allocation2 + $0x98] sm:$0xff] %v2274
    %2403 = vst [vmem:[#allocation2 + $0xa0] sm:$0xff] %v2275
    %2404 = vst [vmem:[#allocation2 + $0xa8] sm:$0xff] %v2276
    %2405 = vst [vmem:[#allocation2 + $0xb0] sm:$0xff] %v2277
    %2406 = vst [vmem:[#allocation2 + $0xb8] sm:$0xff] %v2278
    %2407 = vst [vmem:[#allocation2 + $0xc0] sm:$0xff] %v2279
    %2408 = vst [vmem:[#allocation2 + $0xc8] sm:$0xff] %v2280
    %2409 = vst [vmem:[#allocation2 + $0xd0] sm:$0xff] %v2281
    %2410 = vst [vmem:[#allocation2 + $0xd8] sm:$0xff] %v2282
    %2411 = vst [vmem:[#allocation2 + $0xe0] sm:$0xff] %v2283
    %2412 = vst [vmem:[#allocation2 + $0xe8] sm:$0xff] %v2284
    %2413 = vst [vmem:[#allocation2 + $0xf0] sm:$0xff] %v2285
    %2414 = vst [vmem:[#allocation2 + $0xf8] sm:$0xff] %v2286
    %2415 = vst [vmem:[#allocation2 + $0x100] sm:$0xff] %v2287
    %2416 = vst [vmem:[#allocation2 + $0x108] sm:$0xff] %v2288
    %2417 = vst [vmem:[#allocation2 + $0x110] sm:$0xff] %v2289
    %2418 = vst [vmem:[#allocation2 + $0x118] sm:$0xff] %v2290
    %2419 = vst [vmem:[#allocation2 + $0x120] sm:$0xff] %v2291
    %2420 = vst [vmem:[#allocation2 + $0x128] sm:$0xff] %v2292
    %2421 = vst [vmem:[#allocation2 + $0x130] sm:$0xff] %v2293
    %2422 = vst [vmem:[#allocation2 + $0x138] sm:$0xff] %v2294
    %2423 = vst [vmem:[#allocation2 + $0x140] sm:$0xff] %v2295
    %2424 = vst [vmem:[#allocation2 + $0x148] sm:$0xff] %v2296
    %2425 = vst [vmem:[#allocation2 + $0x150] sm:$0xff] %v2297
    %2426 = vst [vmem:[#allocation2 + $0x158] sm:$0xff] %v2298
    %2427 = vst [vmem:[#allocation2 + $0x160] sm:$0xff] %v2299
    %2428 = vst [vmem:[#allocation2 + $0x168] sm:$0xff] %v2300
    %2429 = vst [vmem:[#allocation2 + $0x170] sm:$0xff] %v2301
    %2430 = vst [vmem:[#allocation2 + $0x178] sm:$0xff] %v2302
    %2431 = vst [vmem:[#allocation2 + $0x180] sm:$0xff] %v2303
    %2432 = vst [vmem:[#allocation2 + $0x188] sm:$0xff] %v2304
    %2433 = vst [vmem:[#allocation2 + $0x190] sm:$0xff] %v2305
    %2434 = vst [vmem:[#allocation2 + $0x198] sm:$0xff] %v2306
    %2435 = vst [vmem:[#allocation2 + $0x1a0] sm:$0xff] %v2307
    %2436 = vst [vmem:[#allocation2 + $0x1a8] sm:$0xff] %v2308
    %2437 = vst [vmem:[#allocation2 + $0x1b0] sm:$0xff] %v2309
    %2438 = vst [vmem:[#allocation2 + $0x1b8] sm:$0xff] %v2310
    %2439 = vst [vmem:[#allocation2 + $0x1c0] sm:$0xff] %v2311
    %2440 = vst [vmem:[#allocation2 + $0x1c8] sm:$0xff] %v2312
    %2441 = vst [vmem:[#allocation2 + $0x1d0] sm:$0xff] %v2313
    %2442 = vst [vmem:[#allocation2 + $0x1d8] sm:$0xff] %v2314
    %2443 = vst [vmem:[#allocation2 + $0x1e0] sm:$0xff] %v2315
    %2444 = vst [vmem:[#allocation2 + $0x1e8] sm:$0xff] %v2316
    %2445 = vst [vmem:[#allocation2 + $0x1f0] sm:$0xff] %v2317
    %2446 = vst [vmem:[#allocation2 + $0x1f8] sm:$0xff] %v2318
    %2447 = vst [vmem:[#allocation2 + $0x200] sm:$0xff] %v2319
    %2448 = vst [vmem:[#allocation2 + $0x208] sm:$0xff] %v2320
    %2449 = vst [vmem:[#allocation2 + $0x210] sm:$0xff] %v2321
    %2450 = vst [vmem:[#allocation2 + $0x218] sm:$0xff] %v2322
    %2451 = vst [vmem:[#allocation2 + $0x220] sm:$0xff] %v2323
    %2452 = vst [vmem:[#allocation2 + $0x228] sm:$0xff] %v2324
    %2453 = vst [vmem:[#allocation2 + $0x230] sm:$0xff] %v2325
    %2454 = vst [vmem:[#allocation2 + $0x238] sm:$0xff] %v2326
    %2455 = vst [vmem:[#allocation2 + $0x240] sm:$0xff] %v2327
    %2456 = vst [vmem:[#allocation2 + $0x248] sm:$0xff] %v2328
    %2457 = vst [vmem:[#allocation2 + $0x250] sm:$0xff] %v2329
    %2458 = vst [vmem:[#allocation2 + $0x258] sm:$0xff] %v2330
    %2459 = vst [vmem:[#allocation2 + $0x260] sm:$0xff] %v2331
    %2460 = vst [vmem:[#allocation2 + $0x268] sm:$0xff] %v2332
    %2461 = vst [vmem:[#allocation2 + $0x270] sm:$0xff] %v2333
    %2462 = vst [vmem:[#allocation2 + $0x278] sm:$0xff] %v2334
    %2463 = vst [vmem:[#allocation2 + $0x280] sm:$0xff] %v2335
    %2464 = vst [vmem:[#allocation2 + $0x288] sm:$0xff] %v2336
    %2465 = vst [vmem:[#allocation2 + $0x290] sm:$0xff] %v2337
    %2466 = vst [vmem:[#allocation2 + $0x298] sm:$0xff] %v2338
    %2467 = vst [vmem:[#allocation2 + $0x2a0] sm:$0xff] %v2339
    %2468 = vst [vmem:[#allocation2 + $0x2a8] sm:$0xff] %v2340
    %2469 = vst [vmem:[#allocation2 + $0x2b0] sm:$0xff] %v2341
    %2470 = vst [vmem:[#allocation2 + $0x2b8] sm:$0xff] %v2342
    %2471 = vst [vmem:[#allocation2 + $0x2c0] sm:$0xff] %v2343
    %2472 = vst [vmem:[#allocation2 + $0x2c8] sm:$0xff] %v2344
    %2473 = vst [vmem:[#allocation2 + $0x2d0] sm:$0xff] %v2345
    %2474 = vst [vmem:[#allocation2 + $0x2d8] sm:$0xff] %v2346
    %2475 = vst [vmem:[#allocation2 + $0x2e0] sm:$0xff] %v2347
    %2476 = vst [vmem:[#allocation2 + $0x2e8] sm:$0xff] %v2348
    %2477 = vst [vmem:[#allocation2 + $0x2f0] sm:$0xff] %v2349
    %2478 = vst [vmem:[#allocation2 + $0x2f8] sm:$0xff] %v2350
    %2479 = vst [vmem:[#allocation2 + $0x300] sm:$0xff] %v2351
    %2480 = vst [vmem:[#allocation2 + $0x308] sm:$0xff] %v2352
    %2481 = vst [vmem:[#allocation2 + $0x310] sm:$0xff] %v2353
    %2482 = vst [vmem:[#allocation2 + $0x318] sm:$0xff] %v2354
    %2483 = vst [vmem:[#allocation2 + $0x320] sm:$0xff] %v2355
    %2484 = vst [vmem:[#allocation2 + $0x328] sm:$0xff] %v2356
    %2485 = vst [vmem:[#allocation2 + $0x330] sm:$0xff] %v2357
    %2486 = vst [vmem:[#allocation2 + $0x338] sm:$0xff] %v2358
    %2487 = vst [vmem:[#allocation2 + $0x340] sm:$0xff] %v2359
    %2488 = vst [vmem:[#allocation2 + $0x348] sm:$0xff] %v2360
    %2489 = vst [vmem:[#allocation2 + $0x350] sm:$0xff] %v2361
    %2490 = vst [vmem:[#allocation2 + $0x358] sm:$0xff] %v2362
    %2491 = vst [vmem:[#allocation2 + $0x360] sm:$0xff] %v2363
    %2492 = vst [vmem:[#allocation2 + $0x368] sm:$0xff] %v2364
    %2493 = vst [vmem:[#allocation2 + $0x370] sm:$0xff] %v2365
    %2494 = vst [vmem:[#allocation2 + $0x378] sm:$0xff] %v2366
    %2495 = vst [vmem:[#allocation2 + $0x380] sm:$0xff] %v2367
    %2496 = vst [vmem:[#allocation2 + $0x388] sm:$0xff] %v2368
    %2497 = vst [vmem:[#allocation2 + $0x390] sm:$0xff] %v2369
    %2498 = vst [vmem:[#allocation2 + $0x398] sm:$0xff] %v2370
    %2499 = vst [vmem:[#allocation2 + $0x3a0] sm:$0xff] %v2371
    %2500 = vst [vmem:[#allocation2 + $0x3a8] sm:$0xff] %v2372
    %2501 = vst [vmem:[#allocation2 + $0x3b0] sm:$0xff] %v2373
    %2502 = vst [vmem:[#allocation2 + $0x3b8] sm:$0xff] %v2374
    %2503 = vst [vmem:[#allocation2 + $0x3c0] sm:$0xff] %v2375
    %2504 = vst [vmem:[#allocation2 + $0x3c8] sm:$0xff] %v2376
    %2505 = vst [vmem:[#allocation2 + $0x3d0] sm:$0xff] %v2377
    %2506 = vst [vmem:[#allocation2 + $0x3d8] sm:$0xff] %v2378
    %2507 = vst [vmem:[#allocation2 + $0x3e0] sm:$0xff] %v2379
    %2508 = vst [vmem:[#allocation2 + $0x3e8] sm:$0xff] %v2380
    %2509 = vst [vmem:[#allocation2 + $0x3f0] sm:$0xff] %v2381
    %2510 = vst [vmem:[#allocation2 + $0x3f8] sm:$0xff] %v2382
    // Predicated region
    $region26: #{wgen_forward.1} parent=1 // pred_check
      _
    $region27: #{wgen_forward.1} parent=1 // pred_check_branch
      %2512 = sbr.rel (0) target = $region29
    $region28: #{wgen_forward.1} parent=1 // pred_region
      %s2514 = ssub.s32 16384, 16384
      %2515 = vsyncadd [#allocation3], %s2514
      %s2516 = sshll.u32 [#allocation2], 4
      %s2517 = int_to_ptr.vmem [resolvable:$true] %s2516
      %2522 = dma.vmem_to_hbm [thread:$0]  %s2517, 16384, %s6, [#allocation3], 256, 256, 16
    $region29: #{wgen_forward.1} parent=1 // pred_fallthru
      _
    // Predicated region
    $region30: #{wgen_forward.1} parent=1 // pred_check
      _
    $region31: #{wgen_forward.1} parent=1 // pred_check_branch
      %2524 = sbr.rel (0) target = $region33
    $region32: #{wgen_forward.1} parent=1 // pred_region
      %2525 = dma.done [#allocation3], 16384
    $region33: #{wgen_forward.1} parent=1 // pred_fallthru
      _
    %2526 = vsyncpa [#allocation3], 1

</llo_original>
